<compile_context>
chip_gen: v7x
topology: tpu7x:2x2x1
jax: 0.10.0
libtpu: 0.0.40
codegen_flags: <defaults>
</compile_context>

<pallas_src>
import jax
import jax.numpy as jnp
from jax.experimental import pallas as pl
from jax.experimental.pallas import tpu as pltpu


def _round_up(x, m):
    return ((x + m - 1) // m) * m


def _cdiv(a, b):
    return (a + b - 1) // b


# ---------------------------------------------------------------------------
# Kernels
# ---------------------------------------------------------------------------
def mlp_kernel(x_ref, w1_ref, b1_ref, w2_ref, b2_ref, o_ref):
    """Fused fc1 -> bias -> ReLU -> fc2 -> bias for one batch tile.

    Weights/biases are fully VMEM-resident (constant index_map)."""
    h = jnp.dot(x_ref[...], w1_ref[...], preferred_element_type=jnp.float32)
    h = jnp.maximum(h + b1_ref[...], 0.0)                 # bias + ReLU in f32
    y = jnp.dot(h.astype(w2_ref.dtype), w2_ref[...],
                preferred_element_type=jnp.float32)
    o_ref[...] = (y + b2_ref[...]).astype(o_ref.dtype)


def mlp_kernel_hidden_tiled(x_ref, w1_ref, b1_ref, w2_ref, b2_ref, o_ref,
                            acc_ref):
    """Same math with the hidden dim tiled (grid axis 1 = reduction axis).

    ReLU is elementwise over hidden units, so
      sum_h relu(x @ W1[:, h] + b1[h]) @ W2[h, :] == relu(x @ W1 + b1) @ W2
    and per-hidden-block accumulation is exact."""
    hi = pl.program_id(1)

    @pl.when(hi == 0)
    def _():
        acc_ref[...] = jnp.zeros_like(acc_ref)

    h = jnp.dot(x_ref[...], w1_ref[...], preferred_element_type=jnp.float32)
    h = jnp.maximum(h + b1_ref[...], 0.0)
    acc_ref[...] += jnp.dot(h.astype(w2_ref.dtype), w2_ref[...],
                            preferred_element_type=jnp.float32)

    @pl.when(hi == pl.num_programs(1) - 1)
    def _():
        o_ref[...] = (acc_ref[...] + b2_ref[...]).astype(o_ref.dtype)


# ---------------------------------------------------------------------------
# Wrapper
# ---------------------------------------------------------------------------
def mlp_forward(x, w1, b1, w2, b2, *, block_b=None, block_h=512,
                force_hidden_tiled=False):
    """Pallas equivalent of PyTorch MLP.forward: fc2(relu(fc1(x))).

    x:  (B, input_size)
    w1: (input_size, hidden)   -- transposed nn.Linear weight
    b1: (hidden,)
    w2: (hidden, output)       -- transposed nn.Linear weight
    b2: (output,)

    Feed x / w1 / w2 in bf16 for a mem-bound win on every generation;
    accumulation stays f32 via preferred_element_type.
    """
    B, in_dim = x.shape
    hidden = w1.shape[1]
    out_dim = w2.shape[1]
    dt = x.dtype
    itemsize = jnp.dtype(dt).itemsize

    w1 = w1.astype(dt)
    w2 = w2.astype(dt)
    b1 = b1.astype(jnp.float32).reshape(1, hidden)
    b2 = b2.astype(jnp.float32).reshape(1, out_dim)

    # Sizes as they will live in VMEM (lanes padded to 128, sublanes to 8).
    in_v, hid_v, out_v = (_round_up(d, 128) for d in (in_dim, hidden, out_dim))

    # Per-generation VMEM capacity (v5e/v6e: 128 MiB, v7x: 64 MiB).  Cap the
    # scoped limit at 75% of physical so the compiler keeps scratch headroom.
    try:
        phys_vmem = int(pltpu.get_tpu_info().vmem_capacity_bytes)
    except Exception:
        phys_vmem = 64 * 1024 * 1024          # conservative; valid on all gens
    vmem_cap = (phys_vmem * 3) // 4

    # Resident-weight footprint (default double-buffered allocation; the
    # constant index_map means they are only DMA'd from HBM once regardless).
    resident_weight_bytes = 2 * ((in_v * hid_v + hid_v * out_v) * itemsize
                                 + 8 * (hid_v + out_v) * 4)
    use_resident = (not force_hidden_tiled) and (
        resident_weight_bytes <= phys_vmem // 2)

    def pick_block_b(weight_footprint, hid_tile_v):
        # Fill leftover VMEM with the batch tile: 2x-buffered x/out tiles plus
        # f32 hidden/output intermediates per row.
        per_row = (2 * (in_v + out_v) * itemsize
                   + (2 * hid_tile_v + 2 * out_v) * 4
                   + hid_tile_v * itemsize)
        budget = (phys_vmem * 3) // 5 - weight_footprint
        bb = max(budget // max(per_row, 1), 8)
        bb = min(bb, 1024, _round_up(B, 8))
        if B >= 16:
            # Keep >= 2 grid steps so pipelining / megacore have work.
            bb = min(bb, _round_up(_cdiv(B, 2), 8))
        return max((bb // 8) * 8, 8)

    flops = 2 * B * (in_dim * hidden + hidden * out_dim)
    bytes_accessed = ((x.size + w1.size + w2.size) * itemsize
                      + (b1.size + b2.size) * 4 + B * out_dim * itemsize)
    cost = pl.CostEstimate(flops=flops, transcendentals=0,
                           bytes_accessed=bytes_accessed)

    if use_resident:
        bb = block_b if block_b is not None else pick_block_b(
            resident_weight_bytes, hid_v)
        bb = max((min(bb, _round_up(B, 8)) // 8) * 8, 8)
        grid = (_cdiv(B, bb),)

        act_bytes = 2 * bb * (in_v + out_v) * itemsize
        tmp_bytes = bb * ((2 * hid_v + out_v) * 4 + hid_v * itemsize)
        need = resident_weight_bytes + act_bytes + tmp_bytes
        vmem_limit = int(min(max(need + need // 2, 32 * 1024 * 1024), vmem_cap))

        grid_spec = pltpu.PrefetchScalarGridSpec(
            num_scalar_prefetch=0,
            grid=grid,
            in_specs=[
                pl.BlockSpec((bb, in_dim), lambda i: (i, 0)),        # x (streamed)
                pl.BlockSpec((in_dim, hidden), lambda i: (0, 0)),    # W1 (resident)
                pl.BlockSpec((1, hidden), lambda i: (0, 0)),         # b1
                pl.BlockSpec((hidden, out_dim), lambda i: (0, 0)),   # W2 (resident)
                pl.BlockSpec((1, out_dim), lambda i: (0, 0)),        # b2
            ],
            out_specs=pl.BlockSpec((bb, out_dim), lambda i: (i, 0)),
        )
        return pl.pallas_call(
            mlp_kernel,
            out_shape=jax.ShapeDtypeStruct((B, out_dim), dt),
            grid_spec=grid_spec,
            compiler_params=pltpu.CompilerParams(
                dimension_semantics=("parallel",),
                vmem_limit_bytes=vmem_limit),
            cost_estimate=cost,
        )(x, w1, b1, w2, b2)

    # ---- hidden-dim tiled path (weights too large to keep fully resident) --
    # TODO(synk): add an input-dim (K) tiled variant for extremely large
    # input_size; only the hidden dim is tiled here.
    bh = max((min(block_h, hidden) // 128) * 128, 128)
    hid_pad = _round_up(hidden, bh)
    if hid_pad != hidden:
        # Zero-padding the hidden dim is exact: relu(0 + 0) = 0 contributes 0.
        w1 = jnp.pad(w1, ((0, 0), (0, hid_pad - hidden)))
        b1 = jnp.pad(b1, ((0, 0), (0, hid_pad - hidden)))
        w2 = jnp.pad(w2, ((0, hid_pad - hidden), (0, 0)))
    n_h = hid_pad // bh
    bh_v = _round_up(bh, 128)

    step_weight_bytes = 2 * ((in_v * bh_v + bh_v * out_v) * itemsize
                             + 8 * (bh_v + out_v) * 4)
    bb = block_b if block_b is not None else pick_block_b(step_weight_bytes,
                                                          bh_v)
    bb = max((min(bb, _round_up(B, 8)) // 8) * 8, 8)
    grid = (_cdiv(B, bb), n_h)

    act_bytes = 2 * bb * (in_v + out_v) * itemsize
    tmp_bytes = bb * ((2 * bh_v + 2 * out_v) * 4 + bh_v * itemsize)
    need = step_weight_bytes + act_bytes + tmp_bytes
    vmem_limit = int(min(max(need + need // 2, 32 * 1024 * 1024), vmem_cap))

    grid_spec = pltpu.PrefetchScalarGridSpec(
        num_scalar_prefetch=0,
        grid=grid,
        in_specs=[
            pl.BlockSpec((bb, in_dim), lambda i, h: (i, 0)),        # x
            pl.BlockSpec((in_dim, bh), lambda i, h: (0, h)),        # W1 slice
            pl.BlockSpec((1, bh), lambda i, h: (0, h)),             # b1 slice
            pl.BlockSpec((bh, out_dim), lambda i, h: (h, 0)),       # W2 slice
            pl.BlockSpec((1, out_dim), lambda i, h: (0, 0)),        # b2
        ],
        out_specs=pl.BlockSpec((bb, out_dim), lambda i, h: (i, 0)),
        scratch_shapes=[pltpu.VMEM((bb, out_dim), jnp.float32)],
    )
    return pl.pallas_call(
        mlp_kernel_hidden_tiled,
        out_shape=jax.ShapeDtypeStruct((B, out_dim), dt),
        grid_spec=grid_spec,
        compiler_params=pltpu.CompilerParams(
            dimension_semantics=("parallel", "arbitrary"),
            vmem_limit_bytes=vmem_limit),
        cost_estimate=cost,
    )(x, w1, b1, w2, b2)


if __name__ == "__main__":
    key = jax.random.PRNGKey(0)
    (kx, k1, k2, k3, k4,
     kx2, k5, k6, k7, k8) = jax.random.split(key, 10)

    # --- main check: fused resident-weight path ----------------------------
    B, input_size, hidden_size, output_size = 1024, 32, 64, 16
    x = jax.random.normal(kx, (B, input_size), dtype=jnp.float32)
    bound1 = 1.0 / (input_size ** 0.5)
    w1 = jax.random.uniform(k1, (input_size, hidden_size), jnp.float32,
                            -bound1, bound1)
    b1 = jax.random.uniform(k2, (hidden_size,), jnp.float32, -bound1, bound1)
    bound2 = 1.0 / (hidden_size ** 0.5)
    w2 = jax.random.uniform(k3, (hidden_size, output_size), jnp.float32,
                            -bound2, bound2)
    b2 = jax.random.uniform(k4, (output_size,), jnp.float32, -bound2, bound2)

    out = jax.block_until_ready(mlp_forward(x, w1, b1, w2, b2))
    ref = jnp.maximum(x @ w1 + b1, 0.0) @ w2 + b2
    assert out.shape == (B, output_size)
    assert jnp.allclose(out, ref, atol=1e-4, rtol=1e-4), \
        float(jnp.max(jnp.abs(out - ref)))

    # --- secondary check: hidden-dim tiled accumulator path ----------------
    B2, in2, hid2, out2 = 256, 32, 256, 16
    x2 = jax.random.normal(kx2, (B2, in2), dtype=jnp.float32)
    bnd1 = 1.0 / (in2 ** 0.5)
    w1b = jax.random.uniform(k5, (in2, hid2), jnp.float32, -bnd1, bnd1)
    b1b = jax.random.uniform(k6, (hid2,), jnp.float32, -bnd1, bnd1)
    bnd2 = 1.0 / (hid2 ** 0.5)
    w2b = jax.random.uniform(k7, (hid2, out2), jnp.float32, -bnd2, bnd2)
    b2b = jax.random.uniform(k8, (out2,), jnp.float32, -bnd2, bnd2)

    out_t = jax.block_until_ready(
        mlp_forward(x2, w1b, b1b, w2b, b2b, block_h=128,
                    force_hidden_tiled=True))
    ref_t = jnp.maximum(x2 @ w1b + b1b, 0.0) @ w2b + b2b
    assert out_t.shape == (B2, out2)
    assert jnp.allclose(out_t, ref_t, atol=1e-4, rtol=1e-4), \
        float(jnp.max(jnp.abs(out_t - ref_t)))

    print("KERNEL_OK")
</pallas_src>

<mosaic_0001>
module attributes {stable_mosaic.version = 11 : i64} {
  func.func @mlp_kernel(%arg0: i32, %arg1: memref<512x32xf32, #tpu.memory_space<vmem>>, %arg2: memref<32x64xf32, #tpu.memory_space<vmem>>, %arg3: memref<1x64xf32, #tpu.memory_space<vmem>>, %arg4: memref<64x16xf32, #tpu.memory_space<vmem>>, %arg5: memref<1x16xf32, #tpu.memory_space<vmem>>, %arg6: memref<512x16xf32, #tpu.memory_space<vmem>>) attributes {dimension_semantics = [#tpu.dimension_semantics<parallel>], iteration_bounds = array<i64: 2>, scalar_prefetch = 0 : i64, scratch_operands = 0 : i64, tpu.core_type = #tpu.core_type<tc>, window_params = [{transform_indices = @transform_0, window_bounds = array<i64: 512, 32>}, {pipeline_mode = #tpu.pipeline_mode<synchronous>, transform_indices = @transform_1, window_bounds = array<i64: 32, 64>}, {pipeline_mode = #tpu.pipeline_mode<synchronous>, transform_indices = @transform_2, window_bounds = array<i64: 1, 64>}, {pipeline_mode = #tpu.pipeline_mode<synchronous>, transform_indices = @transform_3, window_bounds = array<i64: 64, 16>}, {pipeline_mode = #tpu.pipeline_mode<synchronous>, transform_indices = @transform_4, window_bounds = array<i64: 1, 16>}, {transform_indices = @transform_5, window_bounds = array<i64: 512, 16>}]} {
    %c0 = arith.constant 0 : index
    %c0_0 = arith.constant 0 : index
    %0 = vector.load %arg1[%c0, %c0_0] : memref<512x32xf32, #tpu.memory_space<vmem>>, vector<512x32xf32>
    %c0_1 = arith.constant 0 : index
    %c0_2 = arith.constant 0 : index
    %1 = vector.load %arg2[%c0_1, %c0_2] : memref<32x64xf32, #tpu.memory_space<vmem>>, vector<32x64xf32>
    %cst = arith.constant dense<0.000000e+00> : vector<512x64xf32>
    %2 = tpu.matmul %0, %1, %cst {dimension_numbers = #tpu.dot_dimension_numbers<[1], [0], [0], [1], [0, 0, 1, 1], [], []>} : vector<512x32xf32>, vector<32x64xf32>, vector<512x64xf32> -> vector<512x64xf32>
    %c0_3 = arith.constant 0 : index
    %c0_4 = arith.constant 0 : index
    %3 = vector.load %arg3[%c0_3, %c0_4] : memref<1x64xf32, #tpu.memory_space<vmem>>, vector<1x64xf32>
    %4 = vector.broadcast %3 : vector<1x64xf32> to vector<512x64xf32>
    %5 = arith.addf %2, %4 : vector<512x64xf32>
    %cst_5 = arith.constant 0.000000e+00 : f32
    %6 = vector.broadcast %cst_5 : f32 to vector<512x64xf32>
    %7 = arith.maximumf %5, %6 : vector<512x64xf32>
    %c0_6 = arith.constant 0 : index
    %c0_7 = arith.constant 0 : index
    %8 = vector.load %arg4[%c0_6, %c0_7] : memref<64x16xf32, #tpu.memory_space<vmem>>, vector<64x16xf32>
    %cst_8 = arith.constant dense<0.000000e+00> : vector<512x16xf32>
    %9 = tpu.matmul %7, %8, %cst_8 {dimension_numbers = #tpu.dot_dimension_numbers<[1], [0], [0], [1], [0, 0, 1, 1], [], []>} : vector<512x64xf32>, vector<64x16xf32>, vector<512x16xf32> -> vector<512x16xf32>
    %c0_9 = arith.constant 0 : index
    %c0_10 = arith.constant 0 : index
    %10 = vector.load %arg5[%c0_9, %c0_10] : memref<1x16xf32, #tpu.memory_space<vmem>>, vector<1x16xf32>
    %11 = vector.broadcast %10 : vector<1x16xf32> to vector<512x16xf32>
    %12 = arith.addf %9, %11 : vector<512x16xf32>
    %c0_11 = arith.constant 0 : index
    %c0_12 = arith.constant 0 : index
    %13 = vector.load %arg6[%c0_11, %c0_12] : memref<512x16xf32, #tpu.memory_space<vmem>>, vector<512x16xf32>
    tpu.vector_store %arg6[%c0_11, %c0_12], %12 {strides = array<i32>} : memref<512x16xf32, #tpu.memory_space<vmem>>, vector<512x16xf32>,
    return
  }
  func.func @transform_0(%arg0: i32) -> (i32, i32) {
    %c0_i32 = arith.constant 0 : i32
    %c0_i32_0 = arith.constant 0 : i32
    return %arg0, %c0_i32 : i32, i32
  }
  func.func @transform_1(%arg0: i32) -> (i32, i32) {
    %c0_i32 = arith.constant 0 : i32
    %c0_i32_0 = arith.constant 0 : i32
    %c0_i32_1 = arith.constant 0 : i32
    return %c0_i32, %c0_i32_0 : i32, i32
  }
  func.func @transform_2(%arg0: i32) -> (i32, i32) {
    %c0_i32 = arith.constant 0 : i32
    %c0_i32_0 = arith.constant 0 : i32
    %c0_i32_1 = arith.constant 0 : i32
    return %c0_i32, %c0_i32_0 : i32, i32
  }
  func.func @transform_3(%arg0: i32) -> (i32, i32) {
    %c0_i32 = arith.constant 0 : i32
    %c0_i32_0 = arith.constant 0 : i32
    %c0_i32_1 = arith.constant 0 : i32
    return %c0_i32, %c0_i32_0 : i32, i32
  }
  func.func @transform_4(%arg0: i32) -> (i32, i32) {
    %c0_i32 = arith.constant 0 : i32
    %c0_i32_0 = arith.constant 0 : i32
    %c0_i32_1 = arith.constant 0 : i32
    return %c0_i32, %c0_i32_0 : i32, i32
  }
  func.func @transform_5(%arg0: i32) -> (i32, i32) {
    %c0_i32 = arith.constant 0 : i32
    %c0_i32_0 = arith.constant 0 : i32
    return %arg0, %c0_i32 : i32, i32
  }
}

</mosaic_0001>

<llo_original>
// kernel: tpu_custom_call.1
$region0: #{tpu_custom_call.1}
  #allocation0 [shape = 'u32[]', space=smem, size = 0x4, offset = 0x4, fixed_abs, tag = 'smem constant byte address 0x4 - core index']
  #allocation1 [shape = 'u32[144,128]{1,0:T(1,128)}', space=vmem, size = 0x12000, scoped, tag = 'internal scratch']
  %s0 = inlined_call_operand.vmem [shape: f32[1024,32], index: 0, kind: input, shape index: {}]
  %s1 = inlined_call_operand.vmem [shape: f32[32,64], index: 1, kind: input, shape index: {}]
  %s2 = inlined_call_operand.vmem [shape: f32[1,64], index: 2, kind: input, shape index: {}]
  %s3 = inlined_call_operand.vmem [shape: f32[64,16], index: 3, kind: input, shape index: {}]
  %s4 = inlined_call_operand.vmem [shape: f32[1,16], index: 4, kind: input, shape index: {}]
  %s5 = inlined_call_operand.vmem [shape: f32[1024,16], index: 5, kind: output, shape index: {}]
  %s6 = sld [smem:[#allocation0]]
  $region53: #{tpu_custom_call.1} parent=0
    _
  %s8 = ssub.s32 1, %s6
  %s9 = scalar_select 0, %s8, %s6
  loop: start=0, step=1, limit=4
  $region2: #{tpu_custom_call.1} parent=0 // loop_pre_header
    _
  $region3: #{tpu_custom_call.1} parent=0 // loop_header
    %s11 = sphi 0, %s15
    %p12 = scmp.ge.s32.totalorder %s11, 4
    %s21 = sphi 0, %s23
    %s24 = sphi 0, %s21
    %s25 = sphi 0, %s24
    %s41 = sphi 0, %s25
    %s45 = sphi 0, %s45
    %s47 = sphi 0, %s45
    %s48 = sphi 0, %s47
    %s62 = sphi 0, %s48
    %s66 = sphi 0, %s66
    %s68 = sphi 0, %s66
    %s69 = sphi 0, %s68
    %s83 = sphi 0, %s69
    %s87 = sphi 0, %s87
    %s89 = sphi 0, %s87
    %s90 = sphi 0, %s89
    %s104 = sphi 0, %s90
    %s108 = sphi 0, %s108
    %s110 = sphi 0, %s108
    %s111 = sphi 0, %s110
    %s125 = sphi 0, %s111
    %s131 = sphi 0, %s133
    %s134 = sphi 0, %s131
    %s135 = sphi 0, %s134
    %s151 = sphi 0, %s135
  $region4: #{tpu_custom_call.1} parent=0 // loop_header_branch
    %14 = sbr.rel (%p12) target = $region8
  $region5: #{tpu_custom_call.1} parent=0 // loop_body
    %s16 = ssub.s32 %s11, 1
    %s17 = ssub.s32 %s11, 2
    %s18 = sadd.s32 %s11, 1
    %s19 = ssub.s32 %s11, %s18
    %p20 = scmp.eq.s32.totalorder %s19, 0
    %s22 = sadd.s32 %s21, 1
    %s23 = scalar_select %p20, %s21, %s22
    %p26 = pneg %p20
    %p27 = scmp.eq.s32.totalorder %s11, 1
    %p28 = por %p26, %p27
    %p29 = scmp.ne.s32.totalorder %s21, %s24
    %p30 = scmp.eq.s32.totalorder %s11, 0
    %p31 = por %p29, %p30
    %p32 = scmp.ne.s32.totalorder %s21, %s24
    %p33 = scmp.eq.s32.totalorder %s16, 1
    %p34 = por %p32, %p33
    %p35 = scmp.ne.s32.totalorder %s24, %s25
    %p36 = scmp.eq.s32.totalorder %s16, 0
    %p37 = por %p35, %p36
    %p38 = scmp.ne.s32.totalorder %s24, %s25
    %p39 = scmp.eq.s32.totalorder %s17, 1
    %p40 = por %p38, %p39
    %p42 = scmp.ne.s32.totalorder %s25, %s41
    %p43 = scmp.eq.s32.totalorder %s17, 0
    %p44 = por %p42, %p43
    %s46 = sadd.s32 %s45, 1
    %p49 = scmp.eq.s32.totalorder %s11, 1
    %p50 = scmp.ne.s32.totalorder %s45, %s47
    %p51 = scmp.eq.s32.totalorder %s11, 0
    %p52 = por %p50, %p51
    %p53 = scmp.ne.s32.totalorder %s45, %s47
    %p54 = scmp.eq.s32.totalorder %s16, 1
    %p55 = por %p53, %p54
    %p56 = scmp.ne.s32.totalorder %s47, %s48
    %p57 = scmp.eq.s32.totalorder %s16, 0
    %p58 = por %p56, %p57
    %p59 = scmp.ne.s32.totalorder %s47, %s48
    %p60 = scmp.eq.s32.totalorder %s17, 1
    %p61 = por %p59, %p60
    %p63 = scmp.ne.s32.totalorder %s48, %s62
    %p64 = scmp.eq.s32.totalorder %s17, 0
    %p65 = por %p63, %p64
    %s67 = sadd.s32 %s66, 1
    %p70 = scmp.eq.s32.totalorder %s11, 1
    %p71 = scmp.ne.s32.totalorder %s66, %s68
    %p72 = scmp.eq.s32.totalorder %s11, 0
    %p73 = por %p71, %p72
    %p74 = scmp.ne.s32.totalorder %s66, %s68
    %p75 = scmp.eq.s32.totalorder %s16, 1
    %p76 = por %p74, %p75
    %p77 = scmp.ne.s32.totalorder %s68, %s69
    %p78 = scmp.eq.s32.totalorder %s16, 0
    %p79 = por %p77, %p78
    %p80 = scmp.ne.s32.totalorder %s68, %s69
    %p81 = scmp.eq.s32.totalorder %s17, 1
    %p82 = por %p80, %p81
    %p84 = scmp.ne.s32.totalorder %s69, %s83
    %p85 = scmp.eq.s32.totalorder %s17, 0
    %p86 = por %p84, %p85
    %s88 = sadd.s32 %s87, 1
    %p91 = scmp.eq.s32.totalorder %s11, 1
    %p92 = scmp.ne.s32.totalorder %s87, %s89
    %p93 = scmp.eq.s32.totalorder %s11, 0
    %p94 = por %p92, %p93
    %p95 = scmp.ne.s32.totalorder %s87, %s89
    %p96 = scmp.eq.s32.totalorder %s16, 1
    %p97 = por %p95, %p96
    %p98 = scmp.ne.s32.totalorder %s89, %s90
    %p99 = scmp.eq.s32.totalorder %s16, 0
    %p100 = por %p98, %p99
    %p101 = scmp.ne.s32.totalorder %s89, %s90
    %p102 = scmp.eq.s32.totalorder %s17, 1
    %p103 = por %p101, %p102
    %p105 = scmp.ne.s32.totalorder %s90, %s104
    %p106 = scmp.eq.s32.totalorder %s17, 0
    %p107 = por %p105, %p106
    %s109 = sadd.s32 %s108, 1
    %p112 = scmp.eq.s32.totalorder %s11, 1
    %p113 = scmp.ne.s32.totalorder %s108, %s110
    %p114 = scmp.eq.s32.totalorder %s11, 0
    %p115 = por %p113, %p114
    %p116 = scmp.ne.s32.totalorder %s108, %s110
    %p117 = scmp.eq.s32.totalorder %s16, 1
    %p118 = por %p116, %p117
    %p119 = scmp.ne.s32.totalorder %s110, %s111
    %p120 = scmp.eq.s32.totalorder %s16, 0
    %p121 = por %p119, %p120
    %p122 = scmp.ne.s32.totalorder %s110, %s111
    %p123 = scmp.eq.s32.totalorder %s17, 1
    %p124 = por %p122, %p123
    %p126 = scmp.ne.s32.totalorder %s111, %s125
    %p127 = scmp.eq.s32.totalorder %s17, 0
    %p128 = por %p126, %p127
    %s129 = ssub.s32 %s11, %s18
    %p130 = scmp.eq.s32.totalorder %s129, 0
    %s132 = sadd.s32 %s131, 1
    %s133 = scalar_select %p130, %s131, %s132
    %p136 = pneg %p130
    %p137 = scmp.eq.s32.totalorder %s11, 1
    %p138 = por %p136, %p137
    %p139 = scmp.ne.s32.totalorder %s131, %s134
    %p140 = scmp.eq.s32.totalorder %s11, 0
    %p141 = por %p139, %p140
    %p142 = scmp.ne.s32.totalorder %s131, %s134
    %p143 = scmp.eq.s32.totalorder %s16, 1
    %p144 = por %p142, %p143
    %p145 = scmp.ne.s32.totalorder %s134, %s135
    %p146 = scmp.eq.s32.totalorder %s16, 0
    %p147 = por %p145, %p146
    %p148 = scmp.ne.s32.totalorder %s134, %s135
    %p149 = scmp.eq.s32.totalorder %s17, 1
    %p150 = por %p148, %p149
    %p152 = scmp.ne.s32.totalorder %s135, %s151
    %p153 = scmp.eq.s32.totalorder %s17, 0
    %p154 = por %p152, %p153
    %p155 = scmp.le.s32.totalorder 1, %s11
    %p156 = scmp.lt.s32.totalorder %s11, 3
    %p157 = pnand %p155, %p156
    %p158 = pneg %p157
    // Predicated region
    $region9: #{tpu_custom_call.1} parent=5 // pred_check
      _
    $region10: #{tpu_custom_call.1} parent=5 // pred_check_branch
      %160 = sbr.rel (%p157) target = $region12
    $region11: #{tpu_custom_call.1} parent=5 // pred_region
      %s161 = ssub.s32 %s11, 1
      // Predicated region
      $region13: #{tpu_custom_call.1} parent=11 // pred_check
        %p162 = pneg %p58
      $region14: #{tpu_custom_call.1} parent=11 // pred_check_branch
        %164 = sbr.rel (%p162) target = $region16
      $region15: #{tpu_custom_call.1} parent=11 // pred_region
        _
      $region16: #{tpu_custom_call.1} parent=11 // pred_fallthru
        _
      // Predicated region
      $region17: #{tpu_custom_call.1} parent=11 // pred_check
        %p165 = pneg %p79
      $region18: #{tpu_custom_call.1} parent=11 // pred_check_branch
        %167 = sbr.rel (%p165) target = $region20
      $region19: #{tpu_custom_call.1} parent=11 // pred_region
        _
      $region20: #{tpu_custom_call.1} parent=11 // pred_fallthru
        _
      // Predicated region
      $region21: #{tpu_custom_call.1} parent=11 // pred_check
        %p168 = pneg %p100
      $region22: #{tpu_custom_call.1} parent=11 // pred_check_branch
        %170 = sbr.rel (%p168) target = $region24
      $region23: #{tpu_custom_call.1} parent=11 // pred_region
        _
      $region24: #{tpu_custom_call.1} parent=11 // pred_fallthru
        _
      // Predicated region
      $region25: #{tpu_custom_call.1} parent=11 // pred_check
        %p171 = pneg %p121
      $region26: #{tpu_custom_call.1} parent=11 // pred_check_branch
        %173 = sbr.rel (%p171) target = $region28
      $region27: #{tpu_custom_call.1} parent=11 // pred_region
        _
      $region28: #{tpu_custom_call.1} parent=11 // pred_fallthru
        _
    $region12: #{tpu_custom_call.1} parent=5 // pred_fallthru
      _
    %p174 = scmp.lt.s32.totalorder %s11, 2
    // Predicated region
    $region29: #{tpu_custom_call.1} parent=5 // pred_check
      %p175 = pneg %p174
    $region30: #{tpu_custom_call.1} parent=5 // pred_check_branch
      %177 = sbr.rel (%p175) target = $region32
    $region31: #{tpu_custom_call.1} parent=5 // pred_region
      // Predicated region
      $region33: #{tpu_custom_call.1} parent=31 // pred_check
        %p178 = pneg %p31
      $region34: #{tpu_custom_call.1} parent=31 // pred_check_branch
        %180 = sbr.rel (%p178) target = $region36
      $region35: #{tpu_custom_call.1} parent=31 // pred_region
        %s181 = smul.u32 64, %s11
        %p182 = scmp.lt.s32.totalorder %s181, 127
        %s183 = scalar_select %p182, %s181, 127
        %s184 = smul.addr %s183, 8
        %s185 = scalar_lea.vmem %s0, %s184
        %s186 = smul.u32 64, %s11
      $region36: #{tpu_custom_call.1} parent=31 // pred_fallthru
        _
    $region32: #{tpu_custom_call.1} parent=5 // pred_fallthru
      _
    %p187 = scmp.le.s32.totalorder 1, %s11
    %p188 = scmp.lt.s32.totalorder %s11, 3
    %p189 = pnand %p187, %p188
    %p190 = pneg %p189
    // Predicated region
    $region37: #{tpu_custom_call.1} parent=5 // pred_check
      _
    $region38: #{tpu_custom_call.1} parent=5 // pred_check_branch
      %192 = sbr.rel (%p189) target = $region40
    $region39: #{tpu_custom_call.1} parent=5 // pred_region
      %s193 = ssub.s32 %s11, 1
      %s194 = smul.u32 64, %s16
      %p195 = scmp.lt.s32.totalorder %s194, 127
      %s196 = scalar_select %p195, %s194, 127
      %s197 = smul.addr %s196, 8
      %s198 = scalar_lea.vmem %s0, %s197
      %p199 = pneg %p37
      %p200 = pneg %p34
      %p201 = pneg %p58
      %p202 = pneg %p55
      %p203 = pneg %p79
      %p204 = pneg %p76
      %p205 = pneg %p100
      %p206 = pneg %p97
      %p207 = pneg %p121
      %p208 = pneg %p118
      %p209 = pneg %p147
      %p210 = pneg %p144
      %s211 = smul.u32 64, %s16
      %p212 = scmp.lt.s32.totalorder %s211, 127
      %s213 = scalar_select %p212, %s211, 127
      %s214 = smul.addr %s213, 8
      %s215 = scalar_lea.vmem %s5, %s214
      %s216 = smul.u32 64, %s16
      %p217 = scmp.lt.s32.totalorder %s216, 127
      %s218 = scalar_select %p217, %s216, 127
      %s219 = smul.addr %s218, 8
      %s220 = scalar_lea.vmem %s0, %s219
      %s221 = smul.u32 64, %s16
      %s222 = smul.u32 64, %s16
      %p223 = scmp.lt.s32.totalorder %s222, 127
      %s224 = scalar_select %p223, %s222, 127
      %s225 = smul.addr %s224, 8
      %s226 = scalar_lea.vmem %s5, %s225
      %s227 = smul.u32 64, %s16
      %v228 = vld [vmem:[%s220] sm:$0xff]
      %v229 = vld [vmem:[%s220 + $0x8] sm:$0xff]
      %v230 = vld [vmem:[%s220 + $0x10] sm:$0xff]
      %v231 = vld [vmem:[%s220 + $0x18] sm:$0xff]
      %v232 = vld [vmem:[%s220 + $0x20] sm:$0xff]
      %v233 = vld [vmem:[%s220 + $0x28] sm:$0xff]
      %v234 = vld [vmem:[%s220 + $0x30] sm:$0xff]
      %v235 = vld [vmem:[%s220 + $0x38] sm:$0xff]
      %v236 = vld [vmem:[%s220 + $0x40] sm:$0xff]
      %v237 = vld [vmem:[%s220 + $0x48] sm:$0xff]
      %v238 = vld [vmem:[%s220 + $0x50] sm:$0xff]
      %v239 = vld [vmem:[%s220 + $0x58] sm:$0xff]
      %v240 = vld [vmem:[%s220 + $0x60] sm:$0xff]
      %v241 = vld [vmem:[%s220 + $0x68] sm:$0xff]
      %v242 = vld [vmem:[%s220 + $0x70] sm:$0xff]
      %v243 = vld [vmem:[%s220 + $0x78] sm:$0xff]
      %v244 = vld [vmem:[%s220 + $0x80] sm:$0xff]
      %v245 = vld [vmem:[%s220 + $0x88] sm:$0xff]
      %v246 = vld [vmem:[%s220 + $0x90] sm:$0xff]
      %v247 = vld [vmem:[%s220 + $0x98] sm:$0xff]
      %v248 = vld [vmem:[%s220 + $0xa0] sm:$0xff]
      %v249 = vld [vmem:[%s220 + $0xa8] sm:$0xff]
      %v250 = vld [vmem:[%s220 + $0xb0] sm:$0xff]
      %v251 = vld [vmem:[%s220 + $0xb8] sm:$0xff]
      %v252 = vld [vmem:[%s220 + $0xc0] sm:$0xff]
      %v253 = vld [vmem:[%s220 + $0xc8] sm:$0xff]
      %v254 = vld [vmem:[%s220 + $0xd0] sm:$0xff]
      %v255 = vld [vmem:[%s220 + $0xd8] sm:$0xff]
      %v256 = vld [vmem:[%s220 + $0xe0] sm:$0xff]
      %v257 = vld [vmem:[%s220 + $0xe8] sm:$0xff]
      %v258 = vld [vmem:[%s220 + $0xf0] sm:$0xff]
      %v259 = vld [vmem:[%s220 + $0xf8] sm:$0xff]
      %v260 = vld [vmem:[%s220 + $0x100] sm:$0xff]
      %v261 = vld [vmem:[%s220 + $0x108] sm:$0xff]
      %v262 = vld [vmem:[%s220 + $0x110] sm:$0xff]
      %v263 = vld [vmem:[%s220 + $0x118] sm:$0xff]
      %v264 = vld [vmem:[%s220 + $0x120] sm:$0xff]
      %v265 = vld [vmem:[%s220 + $0x128] sm:$0xff]
      %v266 = vld [vmem:[%s220 + $0x130] sm:$0xff]
      %v267 = vld [vmem:[%s220 + $0x138] sm:$0xff]
      %v268 = vld [vmem:[%s220 + $0x140] sm:$0xff]
      %v269 = vld [vmem:[%s220 + $0x148] sm:$0xff]
      %v270 = vld [vmem:[%s220 + $0x150] sm:$0xff]
      %v271 = vld [vmem:[%s220 + $0x158] sm:$0xff]
      %v272 = vld [vmem:[%s220 + $0x160] sm:$0xff]
      %v273 = vld [vmem:[%s220 + $0x168] sm:$0xff]
      %v274 = vld [vmem:[%s220 + $0x170] sm:$0xff]
      %v275 = vld [vmem:[%s220 + $0x178] sm:$0xff]
      %v276 = vld [vmem:[%s220 + $0x180] sm:$0xff]
      %v277 = vld [vmem:[%s220 + $0x188] sm:$0xff]
      %v278 = vld [vmem:[%s220 + $0x190] sm:$0xff]
      %v279 = vld [vmem:[%s220 + $0x198] sm:$0xff]
      %v280 = vld [vmem:[%s220 + $0x1a0] sm:$0xff]
      %v281 = vld [vmem:[%s220 + $0x1a8] sm:$0xff]
      %v282 = vld [vmem:[%s220 + $0x1b0] sm:$0xff]
      %v283 = vld [vmem:[%s220 + $0x1b8] sm:$0xff]
      %v284 = vld [vmem:[%s220 + $0x1c0] sm:$0xff]
      %v285 = vld [vmem:[%s220 + $0x1c8] sm:$0xff]
      %v286 = vld [vmem:[%s220 + $0x1d0] sm:$0xff]
      %v287 = vld [vmem:[%s220 + $0x1d8] sm:$0xff]
      %v288 = vld [vmem:[%s220 + $0x1e0] sm:$0xff]
      %v289 = vld [vmem:[%s220 + $0x1e8] sm:$0xff]
      %v290 = vld [vmem:[%s220 + $0x1f0] sm:$0xff]
      %v291 = vld [vmem:[%s220 + $0x1f8] sm:$0xff]
      %v292 = vld [vmem:[%s1] sm:$0xff]
      %v293 = vld [vmem:[%s1 + $0x8] sm:$0xff]
      %v294 = vld [vmem:[%s1 + $0x10] sm:$0xff]
      %v295 = vld [vmem:[%s1 + $0x18] sm:$0xff]
      %v296 = vld [vmem:[%s2] sm:$0x1]
      %v298 = vlaneseq
      %v299 = vshrl.u32 %v298, 7
      %v300 = vsub.s32 0, %v299
      %v301 = vrot.slane %v296, %v300
      %vm303 = vcmask 261120
      %v305 = vsel %vm303, %v228, 0
      %v308 = vsel %vm303, %v229, 0
      %v311 = vsel %vm303, %v230, 0
      %v314 = vsel %vm303, %v231, 0
      %v317 = vsel %vm303, %v232, 0
      %v320 = vsel %vm303, %v233, 0
      %v323 = vsel %vm303, %v234, 0
      %v326 = vsel %vm303, %v235, 0
      %v329 = vsel %vm303, %v236, 0
      %v332 = vsel %vm303, %v237, 0
      %v335 = vsel %vm303, %v238, 0
      %v338 = vsel %vm303, %v239, 0
      %v341 = vsel %vm303, %v240, 0
      %v344 = vsel %vm303, %v241, 0
      %v347 = vsel %vm303, %v242, 0
      %v350 = vsel %vm303, %v243, 0
      %v353 = vsel %vm303, %v244, 0
      %v356 = vsel %vm303, %v245, 0
      %v359 = vsel %vm303, %v246, 0
      %v362 = vsel %vm303, %v247, 0
      %v365 = vsel %vm303, %v248, 0
      %v368 = vsel %vm303, %v249, 0
      %v371 = vsel %vm303, %v250, 0
      %v374 = vsel %vm303, %v251, 0
      %v377 = vsel %vm303, %v252, 0
      %v380 = vsel %vm303, %v253, 0
      %v383 = vsel %vm303, %v254, 0
      %v386 = vsel %vm303, %v255, 0
      %v389 = vsel %vm303, %v256, 0
      %v392 = vsel %vm303, %v257, 0
      %v395 = vsel %vm303, %v258, 0
      %v398 = vsel %vm303, %v259, 0
      %v401 = vsel %vm303, %v260, 0
      %v404 = vsel %vm303, %v261, 0
      %v407 = vsel %vm303, %v262, 0
      %v410 = vsel %vm303, %v263, 0
      %v413 = vsel %vm303, %v264, 0
      %v416 = vsel %vm303, %v265, 0
      %v419 = vsel %vm303, %v266, 0
      %v422 = vsel %vm303, %v267, 0
      %v425 = vsel %vm303, %v268, 0
      %v428 = vsel %vm303, %v269, 0
      %v431 = vsel %vm303, %v270, 0
      %v434 = vsel %vm303, %v271, 0
      %v437 = vsel %vm303, %v272, 0
      %v440 = vsel %vm303, %v273, 0
      %v443 = vsel %vm303, %v274, 0
      %v446 = vsel %vm303, %v275, 0
      %v449 = vsel %vm303, %v276, 0
      %v452 = vsel %vm303, %v277, 0
      %v455 = vsel %vm303, %v278, 0
      %v458 = vsel %vm303, %v279, 0
      %v461 = vsel %vm303, %v280, 0
      %v464 = vsel %vm303, %v281, 0
      %v467 = vsel %vm303, %v282, 0
      %v470 = vsel %vm303, %v283, 0
      %v473 = vsel %vm303, %v284, 0
      %v476 = vsel %vm303, %v285, 0
      %v479 = vsel %vm303, %v286, 0
      %v482 = vsel %vm303, %v287, 0
      %v485 = vsel %vm303, %v288, 0
      %v488 = vsel %vm303, %v289, 0
      %v491 = vsel %vm303, %v290, 0
      %v494 = vsel %vm303, %v291, 0
      %496 = vmatprep.subr.mxu0 0.0
      %497 = vmatpush1.msra.mxu0 %v292
      %498 = vmatprep.subr.mxu0 0.0
      %499 = vmatpush1.msra.mxu0 %v293
      %500 = vmatprep.subr.mxu0 0.0
      %501 = vmatpush1.msra.mxu0 %v294
      %502 = vmatprep.subr.mxu0 0.0
      %503 = vmatpush1.msra.mxu0 %v295
      %504 = vmatprep.subr.mxu0 0.0
      %505 = vmatpush1.msra.mxu0 0.0
      %506 = vmatprep.subr.mxu0 0.0
      %507 = vmatpush1.msra.mxu0 0.0
      %508 = vmatprep.subr.mxu0 0.0
      %509 = vmatpush1.msra.mxu0 0.0
      %510 = vmatprep.subr.mxu0 0.0
      %511 = vmatpush1.msra.mxu0 0.0
      %512 = vmatprep.subr.mxu0 0.0
      %513 = vmatpush1.msra.mxu0 0.0
      %514 = vmatprep.subr.mxu0 0.0
      %515 = vmatpush1.msra.mxu0 0.0
      %516 = vmatprep.subr.mxu0 0.0
      %517 = vmatpush1.msra.mxu0 0.0
      %518 = vmatprep.subr.mxu0 0.0
      %519 = vmatpush1.msra.mxu0 0.0
      %520 = vmatprep.subr.mxu0 0.0
      %521 = vmatpush1.msra.mxu0 0.0
      %522 = vmatprep.subr.mxu0 0.0
      %523 = vmatpush1.msra.mxu0 0.0
      %524 = vmatprep.subr.mxu0 0.0
      %525 = vmatpush1.msra.mxu0 0.0
      %526 = vmatprep.subr.mxu0 0.0
      %527 = vmatpush1.msra.mxu0 0.0
      %528 = vmatprep.subr.mxu0 0.0
      %529 = vmatpush1.msra.mxu0 0.0
      %530 = vmatprep.subr.mxu0 0.0
      %531 = vmatpush1.msra.mxu0 0.0
      %532 = vmatprep.subr.mxu0 0.0
      %533 = vmatpush1.msra.mxu0 0.0
      %534 = vmatprep.subr.mxu0 0.0
      %535 = vmatpush1.msra.mxu0 0.0
      %536 = vmatprep.subr.mxu0 0.0
      %537 = vmatpush1.msra.mxu0 0.0
      %538 = vmatprep.subr.mxu0 0.0
      %539 = vmatpush1.msra.mxu0 0.0
      %540 = vmatprep.subr.mxu0 0.0
      %541 = vmatpush1.msra.mxu0 0.0
      %542 = vmatprep.subr.mxu0 0.0
      %543 = vmatpush1.msra.mxu0 0.0
      %544 = vmatprep.subr.mxu0 0.0
      %545 = vmatpush1.msra.mxu0 0.0
      %546 = vmatprep.subr.mxu0 0.0
      %547 = vmatpush1.msra.mxu0 0.0
      %548 = vmatprep.subr.mxu0 0.0
      %549 = vmatpush1.msra.mxu0 0.0
      %550 = vmatprep.subr.mxu0 0.0
      %551 = vmatpush1.msra.mxu0 0.0
      %552 = vmatprep.subr.mxu0 0.0
      %553 = vmatpush1.msra.mxu0 0.0
      %554 = vmatprep.subr.mxu0 0.0
      %555 = vmatpush1.msra.mxu0 0.0
      %556 = vmatprep.subr.mxu0 0.0
      %557 = vmatpush1.msra.mxu0 0.0
      %558 = vmatprep.subr.mxu0 0.0
      %559 = vmatpush1.msra.mxu0 0.0
      %560 = vmatprep.mubr.f32.mxu0 0.0
      %561 = vmatmul.mubr.f32.gmra.mrb[0].mxu0 %v305
      %v562 = vpop.f32.mrb[0].mxu0
      %v563 = vadd.f32 %v301, %v562
      %v564 = vpop.f32.mrb[0].mxu0
      %565 = vmatprep.mubr.f32.mxu0 0.0
      %566 = vmatmul.mubr.f32.gmra.mrb[0].mxu0 %v308
      %v567 = vpop.f32.mrb[0].mxu0
      %v568 = vadd.f32 %v301, %v567
      %v569 = vpop.f32.mrb[0].mxu0
      %570 = vmatprep.mubr.f32.mxu0 0.0
      %571 = vmatmul.mubr.f32.gmra.mrb[0].mxu0 %v311
      %v572 = vpop.f32.mrb[0].mxu0
      %v573 = vadd.f32 %v301, %v572
      %v574 = vpop.f32.mrb[0].mxu0
      %575 = vmatprep.mubr.f32.mxu0 0.0
      %576 = vmatmul.mubr.f32.gmra.mrb[0].mxu0 %v314
      %v577 = vpop.f32.mrb[0].mxu0
      %v578 = vadd.f32 %v301, %v577
      %v579 = vpop.f32.mrb[0].mxu0
      %580 = vmatprep.mubr.f32.mxu0 0.0
      %581 = vmatmul.mubr.f32.gmra.mrb[0].mxu0 %v317
      %v582 = vpop.f32.mrb[0].mxu0
      %v583 = vadd.f32 %v301, %v582
      %v584 = vpop.f32.mrb[0].mxu0
      %585 = vmatprep.mubr.f32.mxu0 0.0
      %586 = vmatmul.mubr.f32.gmra.mrb[0].mxu0 %v320
      %v587 = vpop.f32.mrb[0].mxu0
      %v588 = vadd.f32 %v301, %v587
      %v589 = vpop.f32.mrb[0].mxu0
      %590 = vmatprep.mubr.f32.mxu0 0.0
      %591 = vmatmul.mubr.f32.gmra.mrb[0].mxu0 %v323
      %v592 = vpop.f32.mrb[0].mxu0
      %v593 = vadd.f32 %v301, %v592
      %v594 = vpop.f32.mrb[0].mxu0
      %595 = vmatprep.mubr.f32.mxu0 0.0
      %596 = vmatmul.mubr.f32.gmra.mrb[0].mxu0 %v326
      %v597 = vpop.f32.mrb[0].mxu0
      %v598 = vadd.f32 %v301, %v597
      %v599 = vpop.f32.mrb[0].mxu0
      %600 = vmatprep.mubr.f32.mxu0 0.0
      %601 = vmatmul.mubr.f32.gmra.mrb[0].mxu0 %v329
      %v602 = vpop.f32.mrb[0].mxu0
      %v603 = vadd.f32 %v301, %v602
      %v604 = vpop.f32.mrb[0].mxu0
      %605 = vmatprep.mubr.f32.mxu0 0.0
      %606 = vmatmul.mubr.f32.gmra.mrb[0].mxu0 %v332
      %v607 = vpop.f32.mrb[0].mxu0
      %v608 = vadd.f32 %v301, %v607
      %v609 = vpop.f32.mrb[0].mxu0
      %610 = vmatprep.mubr.f32.mxu0 0.0
      %611 = vmatmul.mubr.f32.gmra.mrb[0].mxu0 %v335
      %v612 = vpop.f32.mrb[0].mxu0
      %v613 = vadd.f32 %v301, %v612
      %v614 = vpop.f32.mrb[0].mxu0
      %615 = vmatprep.mubr.f32.mxu0 0.0
      %616 = vmatmul.mubr.f32.gmra.mrb[0].mxu0 %v338
      %v617 = vpop.f32.mrb[0].mxu0
      %v618 = vadd.f32 %v301, %v617
      %v619 = vpop.f32.mrb[0].mxu0
      %620 = vmatprep.mubr.f32.mxu0 0.0
      %621 = vmatmul.mubr.f32.gmra.mrb[0].mxu0 %v341
      %v622 = vpop.f32.mrb[0].mxu0
      %v623 = vadd.f32 %v301, %v622
      %v624 = vpop.f32.mrb[0].mxu0
      %625 = vmatprep.mubr.f32.mxu0 0.0
      %626 = vmatmul.mubr.f32.gmra.mrb[0].mxu0 %v344
      %v627 = vpop.f32.mrb[0].mxu0
      %v628 = vadd.f32 %v301, %v627
      %v629 = vpop.f32.mrb[0].mxu0
      %630 = vmatprep.mubr.f32.mxu0 0.0
      %631 = vmatmul.mubr.f32.gmra.mrb[0].mxu0 %v347
      %v632 = vpop.f32.mrb[0].mxu0
      %v633 = vadd.f32 %v301, %v632
      %v634 = vpop.f32.mrb[0].mxu0
      %635 = vmatprep.mubr.f32.mxu0 0.0
      %636 = vmatmul.mubr.f32.gmra.mrb[0].mxu0 %v350
      %v637 = vpop.f32.mrb[0].mxu0
      %v638 = vadd.f32 %v301, %v637
      %v639 = vpop.f32.mrb[0].mxu0
      %640 = vmatprep.mubr.f32.mxu0 0.0
      %641 = vmatmul.mubr.f32.gmra.mrb[0].mxu0 %v353
      %v642 = vpop.f32.mrb[0].mxu0
      %v643 = vadd.f32 %v301, %v642
      %v644 = vpop.f32.mrb[0].mxu0
      %645 = vmatprep.mubr.f32.mxu0 0.0
      %646 = vmatmul.mubr.f32.gmra.mrb[0].mxu0 %v356
      %v647 = vpop.f32.mrb[0].mxu0
      %v648 = vadd.f32 %v301, %v647
      %v649 = vpop.f32.mrb[0].mxu0
      %650 = vmatprep.mubr.f32.mxu0 0.0
      %651 = vmatmul.mubr.f32.gmra.mrb[0].mxu0 %v359
      %v652 = vpop.f32.mrb[0].mxu0
      %v653 = vadd.f32 %v301, %v652
      %v654 = vpop.f32.mrb[0].mxu0
      %655 = vmatprep.mubr.f32.mxu0 0.0
      %656 = vmatmul.mubr.f32.gmra.mrb[0].mxu0 %v362
      %v657 = vpop.f32.mrb[0].mxu0
      %v658 = vadd.f32 %v301, %v657
      %v659 = vpop.f32.mrb[0].mxu0
      %660 = vmatprep.mubr.f32.mxu0 0.0
      %661 = vmatmul.mubr.f32.gmra.mrb[0].mxu0 %v365
      %v662 = vpop.f32.mrb[0].mxu0
      %v663 = vadd.f32 %v301, %v662
      %v664 = vpop.f32.mrb[0].mxu0
      %665 = vmatprep.mubr.f32.mxu0 0.0
      %666 = vmatmul.mubr.f32.gmra.mrb[0].mxu0 %v368
      %v667 = vpop.f32.mrb[0].mxu0
      %v668 = vadd.f32 %v301, %v667
      %v669 = vpop.f32.mrb[0].mxu0
      %670 = vmatprep.mubr.f32.mxu0 0.0
      %671 = vmatmul.mubr.f32.gmra.mrb[0].mxu0 %v371
      %v672 = vpop.f32.mrb[0].mxu0
      %v673 = vadd.f32 %v301, %v672
      %v674 = vpop.f32.mrb[0].mxu0
      %675 = vmatprep.mubr.f32.mxu0 0.0
      %676 = vmatmul.mubr.f32.gmra.mrb[0].mxu0 %v374
      %v677 = vpop.f32.mrb[0].mxu0
      %v678 = vadd.f32 %v301, %v677
      %v679 = vpop.f32.mrb[0].mxu0
      %680 = vmatprep.mubr.f32.mxu0 0.0
      %681 = vmatmul.mubr.f32.gmra.mrb[0].mxu0 %v377
      %v682 = vpop.f32.mrb[0].mxu0
      %v683 = vadd.f32 %v301, %v682
      %v684 = vpop.f32.mrb[0].mxu0
      %685 = vmatprep.mubr.f32.mxu0 0.0
      %686 = vmatmul.mubr.f32.gmra.mrb[0].mxu0 %v380
      %v687 = vpop.f32.mrb[0].mxu0
      %v688 = vadd.f32 %v301, %v687
      %v689 = vpop.f32.mrb[0].mxu0
      %690 = vmatprep.mubr.f32.mxu0 0.0
      %691 = vmatmul.mubr.f32.gmra.mrb[0].mxu0 %v383
      %v692 = vpop.f32.mrb[0].mxu0
      %v693 = vadd.f32 %v301, %v692
      %v694 = vpop.f32.mrb[0].mxu0
      %695 = vmatprep.mubr.f32.mxu0 0.0
      %696 = vmatmul.mubr.f32.gmra.mrb[0].mxu0 %v386
      %v697 = vpop.f32.mrb[0].mxu0
      %v698 = vadd.f32 %v301, %v697
      %v699 = vpop.f32.mrb[0].mxu0
      %700 = vmatprep.mubr.f32.mxu0 0.0
      %701 = vmatmul.mubr.f32.gmra.mrb[0].mxu0 %v389
      %v702 = vpop.f32.mrb[0].mxu0
      %v703 = vadd.f32 %v301, %v702
      %v704 = vpop.f32.mrb[0].mxu0
      %705 = vmatprep.mubr.f32.mxu0 0.0
      %706 = vmatmul.mubr.f32.gmra.mrb[0].mxu0 %v392
      %v707 = vpop.f32.mrb[0].mxu0
      %v708 = vadd.f32 %v301, %v707
      %v709 = vpop.f32.mrb[0].mxu0
      %710 = vmatprep.mubr.f32.mxu0 0.0
      %711 = vmatmul.mubr.f32.gmra.mrb[0].mxu0 %v395
      %v712 = vpop.f32.mrb[0].mxu0
      %v713 = vadd.f32 %v301, %v712
      %v714 = vpop.f32.mrb[0].mxu0
      %715 = vmatprep.mubr.f32.mxu0 0.0
      %716 = vmatmul.mubr.f32.gmra.mrb[0].mxu0 %v398
      %v717 = vpop.f32.mrb[0].mxu0
      %v718 = vadd.f32 %v301, %v717
      %v719 = vpop.f32.mrb[0].mxu0
      %720 = vmatprep.mubr.f32.mxu0 0.0
      %721 = vmatmul.mubr.f32.gmra.mrb[0].mxu0 %v401
      %v722 = vpop.f32.mrb[0].mxu0
      %v723 = vadd.f32 %v301, %v722
      %v724 = vpop.f32.mrb[0].mxu0
      %725 = vmatprep.mubr.f32.mxu0 0.0
      %726 = vmatmul.mubr.f32.gmra.mrb[0].mxu0 %v404
      %v727 = vpop.f32.mrb[0].mxu0
      %v728 = vadd.f32 %v301, %v727
      %v729 = vpop.f32.mrb[0].mxu0
      %730 = vmatprep.mubr.f32.mxu0 0.0
      %731 = vmatmul.mubr.f32.gmra.mrb[0].mxu0 %v407
      %v732 = vpop.f32.mrb[0].mxu0
      %v733 = vadd.f32 %v301, %v732
      %v734 = vpop.f32.mrb[0].mxu0
      %735 = vmatprep.mubr.f32.mxu0 0.0
      %736 = vmatmul.mubr.f32.gmra.mrb[0].mxu0 %v410
      %v737 = vpop.f32.mrb[0].mxu0
      %v738 = vadd.f32 %v301, %v737
      %v739 = vpop.f32.mrb[0].mxu0
      %740 = vmatprep.mubr.f32.mxu0 0.0
      %741 = vmatmul.mubr.f32.gmra.mrb[0].mxu0 %v413
      %v742 = vpop.f32.mrb[0].mxu0
      %v743 = vadd.f32 %v301, %v742
      %v744 = vpop.f32.mrb[0].mxu0
      %745 = vmatprep.mubr.f32.mxu0 0.0
      %746 = vmatmul.mubr.f32.gmra.mrb[0].mxu0 %v416
      %v747 = vpop.f32.mrb[0].mxu0
      %v748 = vadd.f32 %v301, %v747
      %v749 = vpop.f32.mrb[0].mxu0
      %750 = vmatprep.mubr.f32.mxu0 0.0
      %751 = vmatmul.mubr.f32.gmra.mrb[0].mxu0 %v419
      %v752 = vpop.f32.mrb[0].mxu0
      %v753 = vadd.f32 %v301, %v752
      %v754 = vpop.f32.mrb[0].mxu0
      %755 = vmatprep.mubr.f32.mxu0 0.0
      %756 = vmatmul.mubr.f32.gmra.mrb[0].mxu0 %v422
      %v757 = vpop.f32.mrb[0].mxu0
      %v758 = vadd.f32 %v301, %v757
      %v759 = vpop.f32.mrb[0].mxu0
      %760 = vmatprep.mubr.f32.mxu0 0.0
      %761 = vmatmul.mubr.f32.gmra.mrb[0].mxu0 %v425
      %v762 = vpop.f32.mrb[0].mxu0
      %v763 = vadd.f32 %v301, %v762
      %v764 = vpop.f32.mrb[0].mxu0
      %765 = vmatprep.mubr.f32.mxu0 0.0
      %766 = vmatmul.mubr.f32.gmra.mrb[0].mxu0 %v428
      %v767 = vpop.f32.mrb[0].mxu0
      %v768 = vadd.f32 %v301, %v767
      %v769 = vpop.f32.mrb[0].mxu0
      %770 = vmatprep.mubr.f32.mxu0 0.0
      %771 = vmatmul.mubr.f32.gmra.mrb[0].mxu0 %v431
      %v772 = vpop.f32.mrb[0].mxu0
      %v773 = vadd.f32 %v301, %v772
      %v774 = vpop.f32.mrb[0].mxu0
      %775 = vmatprep.mubr.f32.mxu0 0.0
      %776 = vmatmul.mubr.f32.gmra.mrb[0].mxu0 %v434
      %v777 = vpop.f32.mrb[0].mxu0
      %v778 = vadd.f32 %v301, %v777
      %v779 = vpop.f32.mrb[0].mxu0
      %780 = vmatprep.mubr.f32.mxu0 0.0
      %781 = vmatmul.mubr.f32.gmra.mrb[0].mxu0 %v437
      %v782 = vpop.f32.mrb[0].mxu0
      %v783 = vadd.f32 %v301, %v782
      %v784 = vpop.f32.mrb[0].mxu0
      %785 = vmatprep.mubr.f32.mxu0 0.0
      %786 = vmatmul.mubr.f32.gmra.mrb[0].mxu0 %v440
      %v787 = vpop.f32.mrb[0].mxu0
      %v788 = vadd.f32 %v301, %v787
      %v789 = vpop.f32.mrb[0].mxu0
      %790 = vmatprep.mubr.f32.mxu0 0.0
      %791 = vmatmul.mubr.f32.gmra.mrb[0].mxu0 %v443
      %v792 = vpop.f32.mrb[0].mxu0
      %v793 = vadd.f32 %v301, %v792
      %v794 = vpop.f32.mrb[0].mxu0
      %795 = vmatprep.mubr.f32.mxu0 0.0
      %796 = vmatmul.mubr.f32.gmra.mrb[0].mxu0 %v446
      %v797 = vpop.f32.mrb[0].mxu0
      %v798 = vadd.f32 %v301, %v797
      %v799 = vpop.f32.mrb[0].mxu0
      %800 = vmatprep.mubr.f32.mxu0 0.0
      %801 = vmatmul.mubr.f32.gmra.mrb[0].mxu0 %v449
      %v802 = vpop.f32.mrb[0].mxu0
      %v803 = vadd.f32 %v301, %v802
      %v804 = vpop.f32.mrb[0].mxu0
      %805 = vmatprep.mubr.f32.mxu0 0.0
      %806 = vmatmul.mubr.f32.gmra.mrb[0].mxu0 %v452
      %v807 = vpop.f32.mrb[0].mxu0
      %v808 = vadd.f32 %v301, %v807
      %v809 = vpop.f32.mrb[0].mxu0
      %810 = vmatprep.mubr.f32.mxu0 0.0
      %811 = vmatmul.mubr.f32.gmra.mrb[0].mxu0 %v455
      %v812 = vpop.f32.mrb[0].mxu0
      %v813 = vadd.f32 %v301, %v812
      %v814 = vpop.f32.mrb[0].mxu0
      %815 = vmatprep.mubr.f32.mxu0 0.0
      %816 = vmatmul.mubr.f32.gmra.mrb[0].mxu0 %v458
      %v817 = vpop.f32.mrb[0].mxu0
      %v818 = vadd.f32 %v301, %v817
      %v819 = vpop.f32.mrb[0].mxu0
      %820 = vmatprep.mubr.f32.mxu0 0.0
      %821 = vmatmul.mubr.f32.gmra.mrb[0].mxu0 %v461
      %v822 = vpop.f32.mrb[0].mxu0
      %v823 = vadd.f32 %v301, %v822
      %v824 = vpop.f32.mrb[0].mxu0
      %825 = vmatprep.mubr.f32.mxu0 0.0
      %826 = vmatmul.mubr.f32.gmra.mrb[0].mxu0 %v464
      %v827 = vpop.f32.mrb[0].mxu0
      %v828 = vadd.f32 %v301, %v827
      %v829 = vpop.f32.mrb[0].mxu0
      %830 = vmatprep.mubr.f32.mxu0 0.0
      %831 = vmatmul.mubr.f32.gmra.mrb[0].mxu0 %v467
      %v832 = vpop.f32.mrb[0].mxu0
      %v833 = vadd.f32 %v301, %v832
      %v834 = vpop.f32.mrb[0].mxu0
      %835 = vmatprep.mubr.f32.mxu0 0.0
      %836 = vmatmul.mubr.f32.gmra.mrb[0].mxu0 %v470
      %v837 = vpop.f32.mrb[0].mxu0
      %v838 = vadd.f32 %v301, %v837
      %v839 = vpop.f32.mrb[0].mxu0
      %840 = vmatprep.mubr.f32.mxu0 0.0
      %841 = vmatmul.mubr.f32.gmra.mrb[0].mxu0 %v473
      %v842 = vpop.f32.mrb[0].mxu0
      %v843 = vadd.f32 %v301, %v842
      %v844 = vpop.f32.mrb[0].mxu0
      %845 = vmatprep.mubr.f32.mxu0 0.0
      %846 = vmatmul.mubr.f32.gmra.mrb[0].mxu0 %v476
      %v847 = vpop.f32.mrb[0].mxu0
      %v848 = vadd.f32 %v301, %v847
      %v849 = vpop.f32.mrb[0].mxu0
      %850 = vmatprep.mubr.f32.mxu0 0.0
      %851 = vmatmul.mubr.f32.gmra.mrb[0].mxu0 %v479
      %v852 = vpop.f32.mrb[0].mxu0
      %v853 = vadd.f32 %v301, %v852
      %v854 = vpop.f32.mrb[0].mxu0
      %855 = vmatprep.mubr.f32.mxu0 0.0
      %856 = vmatmul.mubr.f32.gmra.mrb[0].mxu0 %v482
      %v857 = vpop.f32.mrb[0].mxu0
      %v858 = vadd.f32 %v301, %v857
      %v859 = vpop.f32.mrb[0].mxu0
      %860 = vmatprep.mubr.f32.mxu0 0.0
      %861 = vmatmul.mubr.f32.gmra.mrb[0].mxu0 %v485
      %v862 = vpop.f32.mrb[0].mxu0
      %v863 = vadd.f32 %v301, %v862
      %v864 = vpop.f32.mrb[0].mxu0
      %865 = vmatprep.mubr.f32.mxu0 0.0
      %866 = vmatmul.mubr.f32.gmra.mrb[0].mxu0 %v488
      %v867 = vpop.f32.mrb[0].mxu0
      %v868 = vadd.f32 %v301, %v867
      %v869 = vpop.f32.mrb[0].mxu0
      %870 = vmatprep.mubr.f32.mxu0 0.0
      %871 = vmatmul.mubr.f32.gmra.mrb[0].mxu0 %v491
      %v872 = vpop.f32.mrb[0].mxu0
      %v873 = vadd.f32 %v301, %v872
      %v874 = vpop.f32.mrb[0].mxu0
      %875 = vmatprep.mubr.f32.mxu0 0.0
      %876 = vmatmul.mubr.f32.gmra.mrb[0].mxu0 %v494
      %v877 = vpop.f32.mrb[0].mxu0
      %v878 = vadd.f32 %v301, %v877
      %v879 = vpop.f32.mrb[0].mxu0
      %880 = vdwg.mxu0
      %v881 = vmax.f32 %v563, 0.0
      %v882 = vmax.f32 %v568, 0.0
      %v883 = vmax.f32 %v573, 0.0
      %v884 = vmax.f32 %v578, 0.0
      %v885 = vmax.f32 %v583, 0.0
      %v886 = vmax.f32 %v588, 0.0
      %v887 = vmax.f32 %v593, 0.0
      %v888 = vmax.f32 %v598, 0.0
      %v889 = vmax.f32 %v603, 0.0
      %v890 = vmax.f32 %v608, 0.0
      %v891 = vmax.f32 %v613, 0.0
      %v892 = vmax.f32 %v618, 0.0
      %v893 = vmax.f32 %v623, 0.0
      %v894 = vmax.f32 %v628, 0.0
      %v895 = vmax.f32 %v633, 0.0
      %v896 = vmax.f32 %v638, 0.0
      %v897 = vmax.f32 %v643, 0.0
      %v898 = vmax.f32 %v648, 0.0
      %v899 = vmax.f32 %v653, 0.0
      %v900 = vmax.f32 %v658, 0.0
      %v901 = vmax.f32 %v663, 0.0
      %v902 = vmax.f32 %v668, 0.0
      %v903 = vmax.f32 %v673, 0.0
      %v904 = vmax.f32 %v678, 0.0
      %v905 = vmax.f32 %v683, 0.0
      %v906 = vmax.f32 %v688, 0.0
      %v907 = vmax.f32 %v693, 0.0
      %v908 = vmax.f32 %v698, 0.0
      %v909 = vmax.f32 %v703, 0.0
      %v910 = vmax.f32 %v708, 0.0
      %v911 = vmax.f32 %v713, 0.0
      %v912 = vmax.f32 %v718, 0.0
      %v913 = vmax.f32 %v723, 0.0
      %v914 = vmax.f32 %v728, 0.0
      %v915 = vmax.f32 %v733, 0.0
      %v916 = vmax.f32 %v738, 0.0
      %v917 = vmax.f32 %v743, 0.0
      %v918 = vmax.f32 %v748, 0.0
      %v919 = vmax.f32 %v753, 0.0
      %v920 = vmax.f32 %v758, 0.0
      %v921 = vmax.f32 %v763, 0.0
      %v922 = vmax.f32 %v768, 0.0
      %v923 = vmax.f32 %v773, 0.0
      %v924 = vmax.f32 %v778, 0.0
      %v925 = vmax.f32 %v783, 0.0
      %v926 = vmax.f32 %v788, 0.0
      %v927 = vmax.f32 %v793, 0.0
      %v928 = vmax.f32 %v798, 0.0
      %v929 = vmax.f32 %v803, 0.0
      %v930 = vmax.f32 %v808, 0.0
      %v931 = vmax.f32 %v813, 0.0
      %v932 = vmax.f32 %v818, 0.0
      %v933 = vmax.f32 %v823, 0.0
      %v934 = vmax.f32 %v828, 0.0
      %v935 = vmax.f32 %v833, 0.0
      %v936 = vmax.f32 %v838, 0.0
      %v937 = vmax.f32 %v843, 0.0
      %v938 = vmax.f32 %v848, 0.0
      %v939 = vmax.f32 %v853, 0.0
      %v940 = vmax.f32 %v858, 0.0
      %v941 = vmax.f32 %v863, 0.0
      %v942 = vmax.f32 %v868, 0.0
      %v943 = vmax.f32 %v873, 0.0
      %v944 = vmax.f32 %v878, 0.0
      %v945 = vld [vmem:[%s3] sm:$0xff]
      %v946 = vld [vmem:[%s3 + $0x8] sm:$0xff]
      %v947 = vld [vmem:[%s3 + $0x10] sm:$0xff]
      %v948 = vld [vmem:[%s3 + $0x18] sm:$0xff]
      %v949 = vld [vmem:[%s3 + $0x20] sm:$0xff]
      %v950 = vld [vmem:[%s3 + $0x28] sm:$0xff]
      %v951 = vld [vmem:[%s3 + $0x30] sm:$0xff]
      %v952 = vld [vmem:[%s3 + $0x38] sm:$0xff]
      %v953 = vld [vmem:[%s4] sm:$0x1]
      %v955 = vlaneseq
      %v956 = vshrl.u32 %v955, 7
      %v957 = vsub.s32 0, %v956
      %v958 = vrot.slane %v953, %v957
      %vm960 = vcmask 523264
      %v962 = vsel %vm960, %v881, 0
      %v965 = vsel %vm960, %v882, 0
      %v968 = vsel %vm960, %v883, 0
      %v971 = vsel %vm960, %v884, 0
      %v974 = vsel %vm960, %v885, 0
      %v977 = vsel %vm960, %v886, 0
      %v980 = vsel %vm960, %v887, 0
      %v983 = vsel %vm960, %v888, 0
      %v986 = vsel %vm960, %v889, 0
      %v989 = vsel %vm960, %v890, 0
      %v992 = vsel %vm960, %v891, 0
      %v995 = vsel %vm960, %v892, 0
      %v998 = vsel %vm960, %v893, 0
      %v1001 = vsel %vm960, %v894, 0
      %v1004 = vsel %vm960, %v895, 0
      %v1007 = vsel %vm960, %v896, 0
      %v1010 = vsel %vm960, %v897, 0
      %v1013 = vsel %vm960, %v898, 0
      %v1016 = vsel %vm960, %v899, 0
      %v1019 = vsel %vm960, %v900, 0
      %v1022 = vsel %vm960, %v901, 0
      %v1025 = vsel %vm960, %v902, 0
      %v1028 = vsel %vm960, %v903, 0
      %v1031 = vsel %vm960, %v904, 0
      %v1034 = vsel %vm960, %v905, 0
      %v1037 = vsel %vm960, %v906, 0
      %v1040 = vsel %vm960, %v907, 0
      %v1043 = vsel %vm960, %v908, 0
      %v1046 = vsel %vm960, %v909, 0
      %v1049 = vsel %vm960, %v910, 0
      %v1052 = vsel %vm960, %v911, 0
      %v1055 = vsel %vm960, %v912, 0
      %v1058 = vsel %vm960, %v913, 0
      %v1061 = vsel %vm960, %v914, 0
      %v1064 = vsel %vm960, %v915, 0
      %v1067 = vsel %vm960, %v916, 0
      %v1070 = vsel %vm960, %v917, 0
      %v1073 = vsel %vm960, %v918, 0
      %v1076 = vsel %vm960, %v919, 0
      %v1079 = vsel %vm960, %v920, 0
      %v1082 = vsel %vm960, %v921, 0
      %v1085 = vsel %vm960, %v922, 0
      %v1088 = vsel %vm960, %v923, 0
      %v1091 = vsel %vm960, %v924, 0
      %v1094 = vsel %vm960, %v925, 0
      %v1097 = vsel %vm960, %v926, 0
      %v1100 = vsel %vm960, %v927, 0
      %v1103 = vsel %vm960, %v928, 0
      %v1106 = vsel %vm960, %v929, 0
      %v1109 = vsel %vm960, %v930, 0
      %v1112 = vsel %vm960, %v931, 0
      %v1115 = vsel %vm960, %v932, 0
      %v1118 = vsel %vm960, %v933, 0
      %v1121 = vsel %vm960, %v934, 0
      %v1124 = vsel %vm960, %v935, 0
      %v1127 = vsel %vm960, %v936, 0
      %v1130 = vsel %vm960, %v937, 0
      %v1133 = vsel %vm960, %v938, 0
      %v1136 = vsel %vm960, %v939, 0
      %v1139 = vsel %vm960, %v940, 0
      %v1142 = vsel %vm960, %v941, 0
      %v1145 = vsel %vm960, %v942, 0
      %v1148 = vsel %vm960, %v943, 0
      %v1151 = vsel %vm960, %v944, 0
      %1153 = vmatprep.subr.mxu0 0.0
      %1154 = vmatpush1.msra.mxu0 %v945
      %1155 = vmatprep.subr.mxu0 0.0
      %1156 = vmatpush1.msra.mxu0 %v946
      %1157 = vmatprep.subr.mxu0 0.0
      %1158 = vmatpush1.msra.mxu0 %v947
      %1159 = vmatprep.subr.mxu0 0.0
      %1160 = vmatpush1.msra.mxu0 %v948
      %1161 = vmatprep.subr.mxu0 0.0
      %1162 = vmatpush1.msra.mxu0 %v949
      %1163 = vmatprep.subr.mxu0 0.0
      %1164 = vmatpush1.msra.mxu0 %v950
      %1165 = vmatprep.subr.mxu0 0.0
      %1166 = vmatpush1.msra.mxu0 %v951
      %1167 = vmatprep.subr.mxu0 0.0
      %1168 = vmatpush1.msra.mxu0 %v952
      %1169 = vmatprep.subr.mxu0 0.0
      %1170 = vmatpush1.msra.mxu0 0.0
      %1171 = vmatprep.subr.mxu0 0.0
      %1172 = vmatpush1.msra.mxu0 0.0
      %1173 = vmatprep.subr.mxu0 0.0
      %1174 = vmatpush1.msra.mxu0 0.0
      %1175 = vmatprep.subr.mxu0 0.0
      %1176 = vmatpush1.msra.mxu0 0.0
      %1177 = vmatprep.subr.mxu0 0.0
      %1178 = vmatpush1.msra.mxu0 0.0
      %1179 = vmatprep.subr.mxu0 0.0
      %1180 = vmatpush1.msra.mxu0 0.0
      %1181 = vmatprep.subr.mxu0 0.0
      %1182 = vmatpush1.msra.mxu0 0.0
      %1183 = vmatprep.subr.mxu0 0.0
      %1184 = vmatpush1.msra.mxu0 0.0
      %1185 = vmatprep.subr.mxu0 0.0
      %1186 = vmatpush1.msra.mxu0 0.0
      %1187 = vmatprep.subr.mxu0 0.0
      %1188 = vmatpush1.msra.mxu0 0.0
      %1189 = vmatprep.subr.mxu0 0.0
      %1190 = vmatpush1.msra.mxu0 0.0
      %1191 = vmatprep.subr.mxu0 0.0
      %1192 = vmatpush1.msra.mxu0 0.0
      %1193 = vmatprep.subr.mxu0 0.0
      %1194 = vmatpush1.msra.mxu0 0.0
      %1195 = vmatprep.subr.mxu0 0.0
      %1196 = vmatpush1.msra.mxu0 0.0
      %1197 = vmatprep.subr.mxu0 0.0
      %1198 = vmatpush1.msra.mxu0 0.0
      %1199 = vmatprep.subr.mxu0 0.0
      %1200 = vmatpush1.msra.mxu0 0.0
      %1201 = vmatprep.subr.mxu0 0.0
      %1202 = vmatpush1.msra.mxu0 0.0
      %1203 = vmatprep.subr.mxu0 0.0
      %1204 = vmatpush1.msra.mxu0 0.0
      %1205 = vmatprep.subr.mxu0 0.0
      %1206 = vmatpush1.msra.mxu0 0.0
      %1207 = vmatprep.subr.mxu0 0.0
      %1208 = vmatpush1.msra.mxu0 0.0
      %1209 = vmatprep.subr.mxu0 0.0
      %1210 = vmatpush1.msra.mxu0 0.0
      %1211 = vmatprep.subr.mxu0 0.0
      %1212 = vmatpush1.msra.mxu0 0.0
      %1213 = vmatprep.subr.mxu0 0.0
      %1214 = vmatpush1.msra.mxu0 0.0
      %1215 = vmatprep.subr.mxu0 0.0
      %1216 = vmatpush1.msra.mxu0 0.0
      %1217 = vmatprep.mubr.f32.mxu0 0.0
      %1218 = vmatmul.mubr.f32.gmra.mrb[0].mxu0 %v962
      %v1219 = vpop.f32.mrb[0].mxu0
      %v1220 = vadd.f32 %v958, %v1219
      %v1221 = vpop.f32.mrb[0].mxu0
      %1222 = vmatprep.mubr.f32.mxu0 0.0
      %1223 = vmatmul.mubr.f32.gmra.mrb[0].mxu0 %v965
      %v1224 = vpop.f32.mrb[0].mxu0
      %v1225 = vadd.f32 %v958, %v1224
      %v1226 = vpop.f32.mrb[0].mxu0
      %1227 = vmatprep.mubr.f32.mxu0 0.0
      %1228 = vmatmul.mubr.f32.gmra.mrb[0].mxu0 %v968
      %v1229 = vpop.f32.mrb[0].mxu0
      %v1230 = vadd.f32 %v958, %v1229
      %v1231 = vpop.f32.mrb[0].mxu0
      %1232 = vmatprep.mubr.f32.mxu0 0.0
      %1233 = vmatmul.mubr.f32.gmra.mrb[0].mxu0 %v971
      %v1234 = vpop.f32.mrb[0].mxu0
      %v1235 = vadd.f32 %v958, %v1234
      %v1236 = vpop.f32.mrb[0].mxu0
      %1237 = vmatprep.mubr.f32.mxu0 0.0
      %1238 = vmatmul.mubr.f32.gmra.mrb[0].mxu0 %v974
      %v1239 = vpop.f32.mrb[0].mxu0
      %v1240 = vadd.f32 %v958, %v1239
      %v1241 = vpop.f32.mrb[0].mxu0
      %1242 = vmatprep.mubr.f32.mxu0 0.0
      %1243 = vmatmul.mubr.f32.gmra.mrb[0].mxu0 %v977
      %v1244 = vpop.f32.mrb[0].mxu0
      %v1245 = vadd.f32 %v958, %v1244
      %v1246 = vpop.f32.mrb[0].mxu0
      %1247 = vmatprep.mubr.f32.mxu0 0.0
      %1248 = vmatmul.mubr.f32.gmra.mrb[0].mxu0 %v980
      %v1249 = vpop.f32.mrb[0].mxu0
      %v1250 = vadd.f32 %v958, %v1249
      %v1251 = vpop.f32.mrb[0].mxu0
      %1252 = vmatprep.mubr.f32.mxu0 0.0
      %1253 = vmatmul.mubr.f32.gmra.mrb[0].mxu0 %v983
      %v1254 = vpop.f32.mrb[0].mxu0
      %v1255 = vadd.f32 %v958, %v1254
      %v1256 = vpop.f32.mrb[0].mxu0
      %1257 = vmatprep.mubr.f32.mxu0 0.0
      %1258 = vmatmul.mubr.f32.gmra.mrb[0].mxu0 %v986
      %v1259 = vpop.f32.mrb[0].mxu0
      %v1260 = vadd.f32 %v958, %v1259
      %v1261 = vpop.f32.mrb[0].mxu0
      %1262 = vmatprep.mubr.f32.mxu0 0.0
      %1263 = vmatmul.mubr.f32.gmra.mrb[0].mxu0 %v989
      %v1264 = vpop.f32.mrb[0].mxu0
      %v1265 = vadd.f32 %v958, %v1264
      %v1266 = vpop.f32.mrb[0].mxu0
      %1267 = vmatprep.mubr.f32.mxu0 0.0
      %1268 = vmatmul.mubr.f32.gmra.mrb[0].mxu0 %v992
      %v1269 = vpop.f32.mrb[0].mxu0
      %v1270 = vadd.f32 %v958, %v1269
      %v1271 = vpop.f32.mrb[0].mxu0
      %1272 = vmatprep.mubr.f32.mxu0 0.0
      %1273 = vmatmul.mubr.f32.gmra.mrb[0].mxu0 %v995
      %v1274 = vpop.f32.mrb[0].mxu0
      %v1275 = vadd.f32 %v958, %v1274
      %v1276 = vpop.f32.mrb[0].mxu0
      %1277 = vmatprep.mubr.f32.mxu0 0.0
      %1278 = vmatmul.mubr.f32.gmra.mrb[0].mxu0 %v998
      %v1279 = vpop.f32.mrb[0].mxu0
      %v1280 = vadd.f32 %v958, %v1279
      %v1281 = vpop.f32.mrb[0].mxu0
      %1282 = vmatprep.mubr.f32.mxu0 0.0
      %1283 = vmatmul.mubr.f32.gmra.mrb[0].mxu0 %v1001
      %v1284 = vpop.f32.mrb[0].mxu0
      %v1285 = vadd.f32 %v958, %v1284
      %v1286 = vpop.f32.mrb[0].mxu0
      %1287 = vmatprep.mubr.f32.mxu0 0.0
      %1288 = vmatmul.mubr.f32.gmra.mrb[0].mxu0 %v1004
      %v1289 = vpop.f32.mrb[0].mxu0
      %v1290 = vadd.f32 %v958, %v1289
      %v1291 = vpop.f32.mrb[0].mxu0
      %1292 = vmatprep.mubr.f32.mxu0 0.0
      %1293 = vmatmul.mubr.f32.gmra.mrb[0].mxu0 %v1007
      %v1294 = vpop.f32.mrb[0].mxu0
      %v1295 = vadd.f32 %v958, %v1294
      %v1296 = vpop.f32.mrb[0].mxu0
      %1297 = vmatprep.mubr.f32.mxu0 0.0
      %1298 = vmatmul.mubr.f32.gmra.mrb[0].mxu0 %v1010
      %v1299 = vpop.f32.mrb[0].mxu0
      %v1300 = vadd.f32 %v958, %v1299
      %v1301 = vpop.f32.mrb[0].mxu0
      %1302 = vmatprep.mubr.f32.mxu0 0.0
      %1303 = vmatmul.mubr.f32.gmra.mrb[0].mxu0 %v1013
      %v1304 = vpop.f32.mrb[0].mxu0
      %v1305 = vadd.f32 %v958, %v1304
      %v1306 = vpop.f32.mrb[0].mxu0
      %1307 = vmatprep.mubr.f32.mxu0 0.0
      %1308 = vmatmul.mubr.f32.gmra.mrb[0].mxu0 %v1016
      %v1309 = vpop.f32.mrb[0].mxu0
      %v1310 = vadd.f32 %v958, %v1309
      %v1311 = vpop.f32.mrb[0].mxu0
      %1312 = vmatprep.mubr.f32.mxu0 0.0
      %1313 = vmatmul.mubr.f32.gmra.mrb[0].mxu0 %v1019
      %v1314 = vpop.f32.mrb[0].mxu0
      %v1315 = vadd.f32 %v958, %v1314
      %v1316 = vpop.f32.mrb[0].mxu0
      %1317 = vmatprep.mubr.f32.mxu0 0.0
      %1318 = vmatmul.mubr.f32.gmra.mrb[0].mxu0 %v1022
      %v1319 = vpop.f32.mrb[0].mxu0
      %v1320 = vadd.f32 %v958, %v1319
      %v1321 = vpop.f32.mrb[0].mxu0
      %1322 = vmatprep.mubr.f32.mxu0 0.0
      %1323 = vmatmul.mubr.f32.gmra.mrb[0].mxu0 %v1025
      %v1324 = vpop.f32.mrb[0].mxu0
      %v1325 = vadd.f32 %v958, %v1324
      %v1326 = vpop.f32.mrb[0].mxu0
      %1327 = vmatprep.mubr.f32.mxu0 0.0
      %1328 = vmatmul.mubr.f32.gmra.mrb[0].mxu0 %v1028
      %v1329 = vpop.f32.mrb[0].mxu0
      %v1330 = vadd.f32 %v958, %v1329
      %v1331 = vpop.f32.mrb[0].mxu0
      %1332 = vmatprep.mubr.f32.mxu0 0.0
      %1333 = vmatmul.mubr.f32.gmra.mrb[0].mxu0 %v1031
      %v1334 = vpop.f32.mrb[0].mxu0
      %v1335 = vadd.f32 %v958, %v1334
      %v1336 = vpop.f32.mrb[0].mxu0
      %1337 = vmatprep.mubr.f32.mxu0 0.0
      %1338 = vmatmul.mubr.f32.gmra.mrb[0].mxu0 %v1034
      %v1339 = vpop.f32.mrb[0].mxu0
      %v1340 = vadd.f32 %v958, %v1339
      %v1341 = vpop.f32.mrb[0].mxu0
      %1342 = vmatprep.mubr.f32.mxu0 0.0
      %1343 = vmatmul.mubr.f32.gmra.mrb[0].mxu0 %v1037
      %v1344 = vpop.f32.mrb[0].mxu0
      %v1345 = vadd.f32 %v958, %v1344
      %v1346 = vpop.f32.mrb[0].mxu0
      %1347 = vmatprep.mubr.f32.mxu0 0.0
      %1348 = vmatmul.mubr.f32.gmra.mrb[0].mxu0 %v1040
      %v1349 = vpop.f32.mrb[0].mxu0
      %v1350 = vadd.f32 %v958, %v1349
      %v1351 = vpop.f32.mrb[0].mxu0
      %1352 = vmatprep.mubr.f32.mxu0 0.0
      %1353 = vmatmul.mubr.f32.gmra.mrb[0].mxu0 %v1043
      %v1354 = vpop.f32.mrb[0].mxu0
      %v1355 = vadd.f32 %v958, %v1354
      %v1356 = vpop.f32.mrb[0].mxu0
      %1357 = vmatprep.mubr.f32.mxu0 0.0
      %1358 = vmatmul.mubr.f32.gmra.mrb[0].mxu0 %v1046
      %v1359 = vpop.f32.mrb[0].mxu0
      %v1360 = vadd.f32 %v958, %v1359
      %v1361 = vpop.f32.mrb[0].mxu0
      %1362 = vmatprep.mubr.f32.mxu0 0.0
      %1363 = vmatmul.mubr.f32.gmra.mrb[0].mxu0 %v1049
      %v1364 = vpop.f32.mrb[0].mxu0
      %v1365 = vadd.f32 %v958, %v1364
      %v1366 = vpop.f32.mrb[0].mxu0
      %1367 = vmatprep.mubr.f32.mxu0 0.0
      %1368 = vmatmul.mubr.f32.gmra.mrb[0].mxu0 %v1052
      %v1369 = vpop.f32.mrb[0].mxu0
      %v1370 = vadd.f32 %v958, %v1369
      %v1371 = vpop.f32.mrb[0].mxu0
      %1372 = vmatprep.mubr.f32.mxu0 0.0
      %1373 = vmatmul.mubr.f32.gmra.mrb[0].mxu0 %v1055
      %v1374 = vpop.f32.mrb[0].mxu0
      %v1375 = vadd.f32 %v958, %v1374
      %v1376 = vpop.f32.mrb[0].mxu0
      %1377 = vmatprep.mubr.f32.mxu0 0.0
      %1378 = vmatmul.mubr.f32.gmra.mrb[0].mxu0 %v1058
      %v1379 = vpop.f32.mrb[0].mxu0
      %v1380 = vadd.f32 %v958, %v1379
      %v1381 = vpop.f32.mrb[0].mxu0
      %1382 = vmatprep.mubr.f32.mxu0 0.0
      %1383 = vmatmul.mubr.f32.gmra.mrb[0].mxu0 %v1061
      %v1384 = vpop.f32.mrb[0].mxu0
      %v1385 = vadd.f32 %v958, %v1384
      %v1386 = vpop.f32.mrb[0].mxu0
      %1387 = vmatprep.mubr.f32.mxu0 0.0
      %1388 = vmatmul.mubr.f32.gmra.mrb[0].mxu0 %v1064
      %v1389 = vpop.f32.mrb[0].mxu0
      %v1390 = vadd.f32 %v958, %v1389
      %v1391 = vpop.f32.mrb[0].mxu0
      %1392 = vmatprep.mubr.f32.mxu0 0.0
      %1393 = vmatmul.mubr.f32.gmra.mrb[0].mxu0 %v1067
      %v1394 = vpop.f32.mrb[0].mxu0
      %v1395 = vadd.f32 %v958, %v1394
      %v1396 = vpop.f32.mrb[0].mxu0
      %1397 = vmatprep.mubr.f32.mxu0 0.0
      %1398 = vmatmul.mubr.f32.gmra.mrb[0].mxu0 %v1070
      %v1399 = vpop.f32.mrb[0].mxu0
      %v1400 = vadd.f32 %v958, %v1399
      %v1401 = vpop.f32.mrb[0].mxu0
      %1402 = vmatprep.mubr.f32.mxu0 0.0
      %1403 = vmatmul.mubr.f32.gmra.mrb[0].mxu0 %v1073
      %v1404 = vpop.f32.mrb[0].mxu0
      %v1405 = vadd.f32 %v958, %v1404
      %v1406 = vpop.f32.mrb[0].mxu0
      %1407 = vmatprep.mubr.f32.mxu0 0.0
      %1408 = vmatmul.mubr.f32.gmra.mrb[0].mxu0 %v1076
      %v1409 = vpop.f32.mrb[0].mxu0
      %v1410 = vadd.f32 %v958, %v1409
      %v1411 = vpop.f32.mrb[0].mxu0
      %1412 = vmatprep.mubr.f32.mxu0 0.0
      %1413 = vmatmul.mubr.f32.gmra.mrb[0].mxu0 %v1079
      %v1414 = vpop.f32.mrb[0].mxu0
      %v1415 = vadd.f32 %v958, %v1414
      %v1416 = vpop.f32.mrb[0].mxu0
      %1417 = vmatprep.mubr.f32.mxu0 0.0
      %1418 = vmatmul.mubr.f32.gmra.mrb[0].mxu0 %v1082
      %v1419 = vpop.f32.mrb[0].mxu0
      %v1420 = vadd.f32 %v958, %v1419
      %v1421 = vpop.f32.mrb[0].mxu0
      %1422 = vmatprep.mubr.f32.mxu0 0.0
      %1423 = vmatmul.mubr.f32.gmra.mrb[0].mxu0 %v1085
      %v1424 = vpop.f32.mrb[0].mxu0
      %v1425 = vadd.f32 %v958, %v1424
      %v1426 = vpop.f32.mrb[0].mxu0
      %1427 = vmatprep.mubr.f32.mxu0 0.0
      %1428 = vmatmul.mubr.f32.gmra.mrb[0].mxu0 %v1088
      %v1429 = vpop.f32.mrb[0].mxu0
      %v1430 = vadd.f32 %v958, %v1429
      %v1431 = vpop.f32.mrb[0].mxu0
      %1432 = vmatprep.mubr.f32.mxu0 0.0
      %1433 = vmatmul.mubr.f32.gmra.mrb[0].mxu0 %v1091
      %v1434 = vpop.f32.mrb[0].mxu0
      %v1435 = vadd.f32 %v958, %v1434
      %v1436 = vpop.f32.mrb[0].mxu0
      %1437 = vmatprep.mubr.f32.mxu0 0.0
      %1438 = vmatmul.mubr.f32.gmra.mrb[0].mxu0 %v1094
      %v1439 = vpop.f32.mrb[0].mxu0
      %v1440 = vadd.f32 %v958, %v1439
      %v1441 = vpop.f32.mrb[0].mxu0
      %1442 = vmatprep.mubr.f32.mxu0 0.0
      %1443 = vmatmul.mubr.f32.gmra.mrb[0].mxu0 %v1097
      %v1444 = vpop.f32.mrb[0].mxu0
      %v1445 = vadd.f32 %v958, %v1444
      %v1446 = vpop.f32.mrb[0].mxu0
      %1447 = vmatprep.mubr.f32.mxu0 0.0
      %1448 = vmatmul.mubr.f32.gmra.mrb[0].mxu0 %v1100
      %v1449 = vpop.f32.mrb[0].mxu0
      %v1450 = vadd.f32 %v958, %v1449
      %v1451 = vpop.f32.mrb[0].mxu0
      %1452 = vmatprep.mubr.f32.mxu0 0.0
      %1453 = vmatmul.mubr.f32.gmra.mrb[0].mxu0 %v1103
      %v1454 = vpop.f32.mrb[0].mxu0
      %v1455 = vadd.f32 %v958, %v1454
      %v1456 = vpop.f32.mrb[0].mxu0
      %1457 = vmatprep.mubr.f32.mxu0 0.0
      %1458 = vmatmul.mubr.f32.gmra.mrb[0].mxu0 %v1106
      %v1459 = vpop.f32.mrb[0].mxu0
      %v1460 = vadd.f32 %v958, %v1459
      %v1461 = vpop.f32.mrb[0].mxu0
      %1462 = vmatprep.mubr.f32.mxu0 0.0
      %1463 = vmatmul.mubr.f32.gmra.mrb[0].mxu0 %v1109
      %v1464 = vpop.f32.mrb[0].mxu0
      %v1465 = vadd.f32 %v958, %v1464
      %v1466 = vpop.f32.mrb[0].mxu0
      %1467 = vmatprep.mubr.f32.mxu0 0.0
      %1468 = vmatmul.mubr.f32.gmra.mrb[0].mxu0 %v1112
      %v1469 = vpop.f32.mrb[0].mxu0
      %v1470 = vadd.f32 %v958, %v1469
      %v1471 = vpop.f32.mrb[0].mxu0
      %1472 = vmatprep.mubr.f32.mxu0 0.0
      %1473 = vmatmul.mubr.f32.gmra.mrb[0].mxu0 %v1115
      %v1474 = vpop.f32.mrb[0].mxu0
      %v1475 = vadd.f32 %v958, %v1474
      %v1476 = vpop.f32.mrb[0].mxu0
      %1477 = vmatprep.mubr.f32.mxu0 0.0
      %1478 = vmatmul.mubr.f32.gmra.mrb[0].mxu0 %v1118
      %v1479 = vpop.f32.mrb[0].mxu0
      %v1480 = vadd.f32 %v958, %v1479
      %v1481 = vpop.f32.mrb[0].mxu0
      %1482 = vmatprep.mubr.f32.mxu0 0.0
      %1483 = vmatmul.mubr.f32.gmra.mrb[0].mxu0 %v1121
      %v1484 = vpop.f32.mrb[0].mxu0
      %v1485 = vadd.f32 %v958, %v1484
      %v1486 = vpop.f32.mrb[0].mxu0
      %1487 = vmatprep.mubr.f32.mxu0 0.0
      %1488 = vmatmul.mubr.f32.gmra.mrb[0].mxu0 %v1124
      %v1489 = vpop.f32.mrb[0].mxu0
      %v1490 = vadd.f32 %v958, %v1489
      %v1491 = vpop.f32.mrb[0].mxu0
      %1492 = vmatprep.mubr.f32.mxu0 0.0
      %1493 = vmatmul.mubr.f32.gmra.mrb[0].mxu0 %v1127
      %v1494 = vpop.f32.mrb[0].mxu0
      %v1495 = vadd.f32 %v958, %v1494
      %v1496 = vpop.f32.mrb[0].mxu0
      %1497 = vmatprep.mubr.f32.mxu0 0.0
      %1498 = vmatmul.mubr.f32.gmra.mrb[0].mxu0 %v1130
      %v1499 = vpop.f32.mrb[0].mxu0
      %v1500 = vadd.f32 %v958, %v1499
      %v1501 = vpop.f32.mrb[0].mxu0
      %1502 = vmatprep.mubr.f32.mxu0 0.0
      %1503 = vmatmul.mubr.f32.gmra.mrb[0].mxu0 %v1133
      %v1504 = vpop.f32.mrb[0].mxu0
      %v1505 = vadd.f32 %v958, %v1504
      %v1506 = vpop.f32.mrb[0].mxu0
      %1507 = vmatprep.mubr.f32.mxu0 0.0
      %1508 = vmatmul.mubr.f32.gmra.mrb[0].mxu0 %v1136
      %v1509 = vpop.f32.mrb[0].mxu0
      %v1510 = vadd.f32 %v958, %v1509
      %v1511 = vpop.f32.mrb[0].mxu0
      %1512 = vmatprep.mubr.f32.mxu0 0.0
      %1513 = vmatmul.mubr.f32.gmra.mrb[0].mxu0 %v1139
      %v1514 = vpop.f32.mrb[0].mxu0
      %v1515 = vadd.f32 %v958, %v1514
      %v1516 = vpop.f32.mrb[0].mxu0
      %1517 = vmatprep.mubr.f32.mxu0 0.0
      %1518 = vmatmul.mubr.f32.gmra.mrb[0].mxu0 %v1142
      %v1519 = vpop.f32.mrb[0].mxu0
      %v1520 = vadd.f32 %v958, %v1519
      %v1521 = vpop.f32.mrb[0].mxu0
      %1522 = vmatprep.mubr.f32.mxu0 0.0
      %1523 = vmatmul.mubr.f32.gmra.mrb[0].mxu0 %v1145
      %v1524 = vpop.f32.mrb[0].mxu0
      %v1525 = vadd.f32 %v958, %v1524
      %v1526 = vpop.f32.mrb[0].mxu0
      %1527 = vmatprep.mubr.f32.mxu0 0.0
      %1528 = vmatmul.mubr.f32.gmra.mrb[0].mxu0 %v1148
      %v1529 = vpop.f32.mrb[0].mxu0
      %v1530 = vadd.f32 %v958, %v1529
      %v1531 = vpop.f32.mrb[0].mxu0
      %1532 = vmatprep.mubr.f32.mxu0 0.0
      %1533 = vmatmul.mubr.f32.gmra.mrb[0].mxu0 %v1151
      %v1534 = vpop.f32.mrb[0].mxu0
      %v1535 = vadd.f32 %v958, %v1534
      %v1536 = vpop.f32.mrb[0].mxu0
      %1537 = vdwg.mxu0
      %vm1538 = vcmask 130048
      %1539 = vst.msk [vmem:[%s226] sm:$0xff] %vm1538, %v1220
      %1540 = vst.msk [vmem:[%s226 + $0x8] sm:$0xff] %vm1538, %v1225
      %1541 = vst.msk [vmem:[%s226 + $0x10] sm:$0xff] %vm1538, %v1230
      %1542 = vst.msk [vmem:[%s226 + $0x18] sm:$0xff] %vm1538, %v1235
      %1543 = vst.msk [vmem:[%s226 + $0x20] sm:$0xff] %vm1538, %v1240
      %1544 = vst.msk [vmem:[%s226 + $0x28] sm:$0xff] %vm1538, %v1245
      %1545 = vst.msk [vmem:[%s226 + $0x30] sm:$0xff] %vm1538, %v1250
      %1546 = vst.msk [vmem:[%s226 + $0x38] sm:$0xff] %vm1538, %v1255
      %1547 = vst.msk [vmem:[%s226 + $0x40] sm:$0xff] %vm1538, %v1260
      %1548 = vst.msk [vmem:[%s226 + $0x48] sm:$0xff] %vm1538, %v1265
      %1549 = vst.msk [vmem:[%s226 + $0x50] sm:$0xff] %vm1538, %v1270
      %1550 = vst.msk [vmem:[%s226 + $0x58] sm:$0xff] %vm1538, %v1275
      %1551 = vst.msk [vmem:[%s226 + $0x60] sm:$0xff] %vm1538, %v1280
      %1552 = vst.msk [vmem:[%s226 + $0x68] sm:$0xff] %vm1538, %v1285
      %1553 = vst.msk [vmem:[%s226 + $0x70] sm:$0xff] %vm1538, %v1290
      %1554 = vst.msk [vmem:[%s226 + $0x78] sm:$0xff] %vm1538, %v1295
      %1555 = vst.msk [vmem:[%s226 + $0x80] sm:$0xff] %vm1538, %v1300
      %1556 = vst.msk [vmem:[%s226 + $0x88] sm:$0xff] %vm1538, %v1305
      %1557 = vst.msk [vmem:[%s226 + $0x90] sm:$0xff] %vm1538, %v1310
      %1558 = vst.msk [vmem:[%s226 + $0x98] sm:$0xff] %vm1538, %v1315
      %1559 = vst.msk [vmem:[%s226 + $0xa0] sm:$0xff] %vm1538, %v1320
      %1560 = vst.msk [vmem:[%s226 + $0xa8] sm:$0xff] %vm1538, %v1325
      %1561 = vst.msk [vmem:[%s226 + $0xb0] sm:$0xff] %vm1538, %v1330
      %1562 = vst.msk [vmem:[%s226 + $0xb8] sm:$0xff] %vm1538, %v1335
      %1563 = vst.msk [vmem:[%s226 + $0xc0] sm:$0xff] %vm1538, %v1340
      %1564 = vst.msk [vmem:[%s226 + $0xc8] sm:$0xff] %vm1538, %v1345
      %1565 = vst.msk [vmem:[%s226 + $0xd0] sm:$0xff] %vm1538, %v1350
      %1566 = vst.msk [vmem:[%s226 + $0xd8] sm:$0xff] %vm1538, %v1355
      %1567 = vst.msk [vmem:[%s226 + $0xe0] sm:$0xff] %vm1538, %v1360
      %1568 = vst.msk [vmem:[%s226 + $0xe8] sm:$0xff] %vm1538, %v1365
      %1569 = vst.msk [vmem:[%s226 + $0xf0] sm:$0xff] %vm1538, %v1370
      %1570 = vst.msk [vmem:[%s226 + $0xf8] sm:$0xff] %vm1538, %v1375
      %1571 = vst.msk [vmem:[%s226 + $0x100] sm:$0xff] %vm1538, %v1380
      %1572 = vst.msk [vmem:[%s226 + $0x108] sm:$0xff] %vm1538, %v1385
      %1573 = vst.msk [vmem:[%s226 + $0x110] sm:$0xff] %vm1538, %v1390
      %1574 = vst.msk [vmem:[%s226 + $0x118] sm:$0xff] %vm1538, %v1395
      %1575 = vst.msk [vmem:[%s226 + $0x120] sm:$0xff] %vm1538, %v1400
      %1576 = vst.msk [vmem:[%s226 + $0x128] sm:$0xff] %vm1538, %v1405
      %1577 = vst.msk [vmem:[%s226 + $0x130] sm:$0xff] %vm1538, %v1410
      %1578 = vst.msk [vmem:[%s226 + $0x138] sm:$0xff] %vm1538, %v1415
      %1579 = vst.msk [vmem:[%s226 + $0x140] sm:$0xff] %vm1538, %v1420
      %1580 = vst.msk [vmem:[%s226 + $0x148] sm:$0xff] %vm1538, %v1425
      %1581 = vst.msk [vmem:[%s226 + $0x150] sm:$0xff] %vm1538, %v1430
      %1582 = vst.msk [vmem:[%s226 + $0x158] sm:$0xff] %vm1538, %v1435
      %1583 = vst.msk [vmem:[%s226 + $0x160] sm:$0xff] %vm1538, %v1440
      %1584 = vst.msk [vmem:[%s226 + $0x168] sm:$0xff] %vm1538, %v1445
      %1585 = vst.msk [vmem:[%s226 + $0x170] sm:$0xff] %vm1538, %v1450
      %1586 = vst.msk [vmem:[%s226 + $0x178] sm:$0xff] %vm1538, %v1455
      %1587 = vst.msk [vmem:[%s226 + $0x180] sm:$0xff] %vm1538, %v1460
      %1588 = vst.msk [vmem:[%s226 + $0x188] sm:$0xff] %vm1538, %v1465
      %1589 = vst.msk [vmem:[%s226 + $0x190] sm:$0xff] %vm1538, %v1470
      %1590 = vst.msk [vmem:[%s226 + $0x198] sm:$0xff] %vm1538, %v1475
      %1591 = vst.msk [vmem:[%s226 + $0x1a0] sm:$0xff] %vm1538, %v1480
      %1592 = vst.msk [vmem:[%s226 + $0x1a8] sm:$0xff] %vm1538, %v1485
      %1593 = vst.msk [vmem:[%s226 + $0x1b0] sm:$0xff] %vm1538, %v1490
      %1594 = vst.msk [vmem:[%s226 + $0x1b8] sm:$0xff] %vm1538, %v1495
      %1595 = vst.msk [vmem:[%s226 + $0x1c0] sm:$0xff] %vm1538, %v1500
      %1596 = vst.msk [vmem:[%s226 + $0x1c8] sm:$0xff] %vm1538, %v1505
      %1597 = vst.msk [vmem:[%s226 + $0x1d0] sm:$0xff] %vm1538, %v1510
      %1598 = vst.msk [vmem:[%s226 + $0x1d8] sm:$0xff] %vm1538, %v1515
      %1599 = vst.msk [vmem:[%s226 + $0x1e0] sm:$0xff] %vm1538, %v1520
      %1600 = vst.msk [vmem:[%s226 + $0x1e8] sm:$0xff] %vm1538, %v1525
      %1601 = vst.msk [vmem:[%s226 + $0x1f0] sm:$0xff] %vm1538, %v1530
      %1602 = vst.msk [vmem:[%s226 + $0x1f8] sm:$0xff] %vm1538, %v1535
      %s1603 = smul.u32 64, %s16
      %p1604 = scmp.lt.s32.totalorder %s1603, 127
      %s1605 = scalar_select %p1604, %s1603, 127
      %s1606 = smul.addr %s1605, 8
      %s1607 = scalar_lea.vmem %s5, %s1606
      // Predicated region
      $region41: #{tpu_custom_call.1} parent=39 // pred_check
        %p1608 = pneg %p144
      $region42: #{tpu_custom_call.1} parent=39 // pred_check_branch
        %1610 = sbr.rel (%p1608) target = $region44
      $region43: #{tpu_custom_call.1} parent=39 // pred_region
        %s1611 = smul.u32 64, %s16
      $region44: #{tpu_custom_call.1} parent=39 // pred_fallthru
        _
    $region40: #{tpu_custom_call.1} parent=5 // pred_fallthru
      _
    %p1612 = scmp.le.s32.totalorder 2, %s11
    // Predicated region
    $region45: #{tpu_custom_call.1} parent=5 // pred_check
      %p1613 = pneg %p1612
    $region46: #{tpu_custom_call.1} parent=5 // pred_check_branch
      %1615 = sbr.rel (%p1613) target = $region48
    $region47: #{tpu_custom_call.1} parent=5 // pred_region
      %s1616 = ssub.s32 %s11, 2
      // Predicated region
      $region49: #{tpu_custom_call.1} parent=47 // pred_check
        %p1617 = pneg %p150
      $region50: #{tpu_custom_call.1} parent=47 // pred_check_branch
        %1619 = sbr.rel (%p1617) target = $region52
      $region51: #{tpu_custom_call.1} parent=47 // pred_region
        %s1620 = smul.u32 64, %s17
        %p1621 = scmp.lt.s32.totalorder %s1620, 127
        %s1622 = scalar_select %p1621, %s1620, 127
        %s1623 = smul.addr %s1622, 8
        %s1624 = scalar_lea.vmem %s5, %s1623
      $region52: #{tpu_custom_call.1} parent=47 // pred_fallthru
        _
    $region48: #{tpu_custom_call.1} parent=5 // pred_fallthru
      _
  $region6: #{tpu_custom_call.1} parent=0 // loop_footer
    %s15 = sadd.s32 1, %s11
  $region7: #{tpu_custom_call.1} parent=0 // loop_footer_branch
    %10 = sbr.rel target = $region3
  $region8: #{tpu_custom_call.1} parent=0 // loop_exit
    _

</llo_original>
